<compile_context>
chip_gen: v5e
topology: v5e:2x2
jax: 0.10.0
libtpu: 0.0.40
codegen_flags: <defaults>
</compile_context>

<pallas_src>
import functools

import jax
import jax.numpy as jnp
from jax.experimental import pallas as pl
from jax.experimental.pallas import tpu as pltpu


def _scsa_kernel(x_ref, w3_ref, v_ref, p_ref, e_ref, out_ref, *, G, C2, H, W):
    """SCSA forward for a block of whole images.

    x_ref  : (Nb, c, HW)        activations, c = G * 2 * C2, HW = H * W
    w3_ref : (3, C2, C2)        stacked 1x1 weights [conv1, conv_h, conv_w]
    v_ref  : (C2, 8)            packed per-channel vectors
                                cols: [cw, cb, b1, gn_w, gn_b, bh, bw, 0]
    p_ref  : (HW, H+W+1)        pooling matrix [mean-over-W | mean-over-H | 1/HW]
    e_ref  : (H+W, HW)          expansion matrix [eh ; ew] (0/1 entries)
    out_ref: (Nb, c//2, 2*HW)   channel_shuffle(groups=2) layout (see wrapper)
    """
    Nb = x_ref.shape[0]
    c = x_ref.shape[1]
    HW = H * W
    S = H + W
    B = Nb * G
    f32 = jnp.float32
    out_dtype = out_ref.dtype

    # ---- one MXU pass produces every pooled statistic ----------------------
    pooled = jnp.dot(x_ref[...].reshape(Nb * c, HW).astype(f32), p_ref[...],
                     preferred_element_type=f32)               # (Nb*c, S+1)
    pooled = pooled.reshape(B, 2 * C2, S + 1)

    # ---- channel-attention branch: per-channel sigmoid gate ----------------
    gap = pooled[:, :C2, S:S + 1]                              # (B, C2, 1)
    ch_gate = jax.nn.sigmoid(v_ref[:, 0:1][None] * gap + v_ref[:, 1:2][None])

    # ---- spatial-attention branch: descriptor path (small tensors) ---------
    y = pooled[:, C2:, :S]                                     # (B, C2, H+W)
    x_s = pooled[:, C2:, S:S + 1]                              # (B, C2, 1)

    # conv1 (1x1) on the fused [x_h | x_w] descriptor.
    w1b = jnp.broadcast_to(w3_ref[0][None], (B, C2, C2))
    y = jnp.einsum('boc,bcs->bos', w1b, y,
                   preferred_element_type=f32) + v_ref[:, 2:3][None]

    # GroupNorm(num_groups == num_channels): per-channel over H+W (done once).
    mu = jnp.mean(y, axis=2, keepdims=True)
    var = jnp.mean(jnp.square(y - mu), axis=2, keepdims=True)
    y = (y - mu) * jax.lax.rsqrt(var + 1e-5)
    y = y * v_ref[:, 3:4][None] + v_ref[:, 4:5][None]
    # h_swish: x * relu6(x + 3) / 6
    y = y * jnp.clip(y + 3.0, 0.0, 6.0) * (1.0 / 6.0)

    # conv_h / conv_w (1x1); fold the global mean x_s into the tiny
    # H-descriptor instead of the full-HW logits.
    whb = jnp.broadcast_to(w3_ref[1][None], (B, C2, C2))
    wwb = jnp.broadcast_to(w3_ref[2][None], (B, C2, C2))
    a_h = jnp.einsum('boc,bch->boh', whb, y[:, :, :H],
                     preferred_element_type=f32) + v_ref[:, 5:6][None]
    a_w = jnp.einsum('boc,bcw->bow', wwb, y[:, :, H:],
                     preferred_element_type=f32) + v_ref[:, 6:7][None]
    a_h = a_h * x_s                                            # (B, C2, H)

    # ---- per-group full-HW work + shuffled output writes --------------------
    # out_ref element (b, r, s*HW + p) == post-shuffle channel 2*r + s, so the
    # channel_shuffle is produced directly by these writes.  Working per group
    # keeps full-size f32 live ranges down to (Nb, C2, HW) slabs.
    a_h4 = a_h.reshape(Nb, G, C2, H)
    a_w4 = a_w.reshape(Nb, G, C2, W)
    gate4 = ch_gate.reshape(Nb, G, C2, 1)
    eh = e_ref[:H, :]                                          # (H, HW)
    ew = e_ref[H:, :]                                          # (W, HW)

    for g in range(G):
        c0 = g * 2 * C2
        # channel-attention half of this group
        s_c = (2 * g) // G
        r_c = (2 * g - s_c * G) * C2
        x0_g = x_ref[:, c0:c0 + C2, :].astype(f32)             # (Nb, C2, HW)
        out_ref[:, r_c:r_c + C2, s_c * HW:(s_c + 1) * HW] = (
            x0_g * gate4[:, g]).astype(out_dtype)

        # spatial-attention half of this group
        s_s = (2 * g + 1) // G
        r_s = (2 * g + 1 - s_s * G) * C2
        ah_flat = jnp.dot(a_h4[:, g].reshape(Nb * C2, H), eh,
                          preferred_element_type=f32)
        aw_flat = jnp.dot(a_w4[:, g].reshape(Nb * C2, W), ew,
                          preferred_element_type=f32)
        logits = (ah_flat * aw_flat).reshape(Nb, C2, HW)
        x1_g = x_ref[:, c0 + C2:c0 + 2 * C2, :].astype(f32)
        out_ref[:, r_s:r_s + C2, s_s * HW:(s_s + 1) * HW] = (
            x1_g * jax.nn.sigmoid(logits)).astype(out_dtype)


def _vmem_capacity_bytes():
    # Per-core VMEM differs across generations (v5e/v6e: 128 MiB, v7x: 64 MiB).
    try:
        return int(pltpu.get_tpu_info().vmem_capacity_bytes)
    except Exception:
        return 64 << 20            # conservative fallback (v7x per-TensorCore)


def _pick_num_block_images(n, per_image_bytes, budget_bytes):
    """Largest divisor of n whose estimated working set fits the budget."""
    cap = max(1, budget_bytes // max(per_image_bytes, 1))
    nb = 1
    for d in range(1, n + 1):
        if n % d == 0 and d <= cap:
            nb = d
    # v7x has two TensorCores: prefer >=2 "parallel" grid steps when each step
    # still moves a substantial tile (>= 8 MiB).  Otherwise a single big step
    # avoids the ~0.35 us/step pipeline overhead (v5e/v6e are single-TC).
    if nb == n and n > 1:
        smaller = [d for d in range(1, n) if n % d == 0 and d <= cap]
        if smaller and max(smaller) * per_image_bytes >= (8 << 20):
            nb = max(smaller)
    return nb


def scsa_forward(x, params, G):
    n, c, h, w = x.shape
    assert c % (2 * G) == 0
    C2 = c // (2 * G)
    HW = h * w
    S = h + w
    dtype = x.dtype
    itemsize = jnp.dtype(dtype).itemsize

    (cw, cb, w1, b1, gnw, gnb, wh, bh, ww, bw) = params

    # ---- pack parameters into 3 small kernel inputs ------------------------
    w3 = jnp.stack([w1, wh, ww], axis=0).astype(jnp.float32)           # (3,C2,C2)
    v = jnp.concatenate(
        [cw, cb, b1, gnw, gnb, bh, bw, jnp.zeros((C2, 1), jnp.float32)],
        axis=1).astype(jnp.float32)                                    # (C2, 8)

    # ---- constant pooling / expansion matrices (flat HW <-> H / W) ---------
    ids = jnp.arange(HW)
    row = ids // w
    col = ids % w
    mh = (row[:, None] == jnp.arange(h)[None, :]).astype(jnp.float32) / w
    mw = (col[:, None] == jnp.arange(w)[None, :]).astype(jnp.float32) / h
    ms = jnp.full((HW, 1), 1.0 / HW, jnp.float32)
    pmat = jnp.concatenate([mh, mw, ms], axis=1)                       # (HW, S+1)
    eh = (jnp.arange(h)[:, None] == row[None, :]).astype(jnp.float32)
    ew = (jnp.arange(w)[:, None] == col[None, :]).astype(jnp.float32)
    emat = jnp.concatenate([eh, ew], axis=0)                           # (S, HW)
    # TODO(synk): for very large H/W the (HW, H+W) constants approach VMEM
    # size; a spatially-chunked variant (or XLU-reduction pooling) is needed.

    # ---- generation-aware block sizing --------------------------------------
    vmem_cap = _vmem_capacity_bytes()
    vmem_limit = int(min(vmem_cap * 0.85, 112 * (1 << 20)))
    fixed = 2 * 4 * (HW * (S + 1) + S * HW + 3 * C2 * C2 + C2 * 8)
    # double-buffered in+out tiles (io dtype) + ~1.75 full-tile f32 intermediates
    per_image = c * HW * (4 * itemsize + 7)
    budget = max(int(vmem_limit * 0.7) - fixed, per_image)
    nb = _pick_num_block_images(n, per_image, budget)
    grid = (n // nb,)

    # (n, c, h, w) -> (n, c, H*W): contiguous, keeps the activation dtype.
    xg = x.reshape(n, c, HW)

    kernel = functools.partial(_scsa_kernel, G=G, C2=C2, H=h, W=w)

    grid_spec = pltpu.PrefetchScalarGridSpec(
        num_scalar_prefetch=0,
        grid=grid,
        in_specs=[
            pl.BlockSpec((nb, c, HW), lambda i: (i, 0, 0)),     # activations
            # constant-index inputs: Pallas skips re-fetch when the block
            # index does not change between steps.
            pl.BlockSpec((3, C2, C2), lambda i: (0, 0, 0)),     # 1x1 weights
            pl.BlockSpec((C2, 8), lambda i: (0, 0)),            # packed vectors
            pl.BlockSpec((HW, S + 1), lambda i: (0, 0)),        # pooling matrix
            pl.BlockSpec((S, HW), lambda i: (0, 0)),            # expansion matrix
        ],
        out_specs=pl.BlockSpec((nb, c // 2, 2 * HW), lambda i: (i, 0, 0)),
    )

    out = pl.pallas_call(
        kernel,
        out_shape=jax.ShapeDtypeStruct((n, c // 2, 2 * HW), dtype),
        grid_spec=grid_spec,
        compiler_params=pltpu.CompilerParams(
            dimension_semantics=("parallel",),
            vmem_limit_bytes=vmem_limit),
    )(xg, w3, v, pmat, emat)

    # (n, c//2, 2*HW) -> (n, c, h, w) is a contiguous reinterpretation: the
    # channel_shuffle(groups=2) interleave was already produced in-kernel.
    return out.reshape(n, c, h, w)


def scsa_reference(x, params, G):
    """Pure-JAX reference mirroring the PyTorch forward exactly."""
    n, c, h, w = x.shape
    C2 = c // (2 * G)
    (cw, cb, w1, b1, gnw, gnb, wh, bh, ww, bw) = params
    hp = jax.lax.Precision.HIGHEST

    xg = x.reshape(n * G, 2 * C2, h, w)
    x0, x1 = xg[:, :C2], xg[:, C2:]

    gap = jnp.mean(x0, axis=(2, 3), keepdims=True)
    xc = x0 * jax.nn.sigmoid(cw[None, :, :, None] * gap + cb[None, :, :, None])

    x_h = jnp.mean(x1, axis=3)                         # (B, C2, H)
    x_w = jnp.mean(x1, axis=2)                         # (B, C2, W)
    x_s = jnp.mean(x1, axis=(2, 3), keepdims=True)     # (B, C2, 1, 1)

    y = jnp.concatenate([x_h, x_w], axis=2)            # (B, C2, H+W)
    y = jnp.einsum('oc,bcs->bos', w1, y, precision=hp) + b1[None]
    mu = jnp.mean(y, axis=2, keepdims=True)
    var = jnp.mean((y - mu) ** 2, axis=2, keepdims=True)
    y = (y - mu) / jnp.sqrt(var + 1e-5)
    y = y * gnw[None] + gnb[None]
    y = y * jnp.clip(y + 3.0, 0.0, 6.0) / 6.0

    yh, yw = y[:, :, :h], y[:, :, h:]
    a_h = jnp.einsum('oc,bch->boh', wh, yh, precision=hp) + bh[None]
    a_w = jnp.einsum('oc,bcw->bow', ww, yw, precision=hp) + bw[None]
    logits = a_h[:, :, :, None] * a_w[:, :, None, :] * x_s
    xs = x1 * jax.nn.sigmoid(logits)

    out = jnp.concatenate([xc, xs], axis=1).reshape(n, c, h, w)
    out = out.reshape(n, 2, c // 2, h, w).transpose(0, 2, 1, 3, 4).reshape(n, c, h, w)
    return out


def init_params(C2, key):
    """Deterministic synthetic parameter init (shapes match SCSA.__init__)."""
    k = jax.random.split(key, 6)
    cw = jnp.zeros((C2, 1), jnp.float32)                       # cweight = zeros
    cb = jnp.ones((C2, 1), jnp.float32)                        # cbias   = ones
    w1 = 0.1 * jax.random.normal(k[0], (C2, C2), jnp.float32)  # conv1 1x1
    b1 = 0.1 * jax.random.normal(k[1], (C2, 1), jnp.float32)
    gnw = jnp.ones((C2, 1), jnp.float32)                       # GroupNorm affine
    gnb = jnp.zeros((C2, 1), jnp.float32)
    wh = 0.1 * jax.random.normal(k[2], (C2, C2), jnp.float32)  # conv_h 1x1
    bh = 0.1 * jax.random.normal(k[3], (C2, 1), jnp.float32)
    ww = 0.1 * jax.random.normal(k[4], (C2, C2), jnp.float32)  # conv_w 1x1
    bw = 0.1 * jax.random.normal(k[5], (C2, 1), jnp.float32)
    return (cw, cb, w1, b1, gnw, gnb, wh, bh, ww, bw)


if __name__ == "__main__":
    # small shapes consistent with the module: channel divisible by 2*G
    n, channel, G, H, W = 2, 32, 2, 16, 16
    C2 = channel // (2 * G)

    key = jax.random.PRNGKey(0)
    kx, kp = jax.random.split(key)
    x = jax.random.normal(kx, (n, channel, H, W), jnp.float32)
    params = init_params(C2, kp)

    out = scsa_forward(x, params, G)
    out = jax.block_until_ready(out)
    assert out.shape == (n, channel, H, W)
    assert bool(jnp.all(jnp.isfinite(out)))

    ref = scsa_reference(x, params, G)
    assert jnp.allclose(out, ref, rtol=1e-2, atol=1e-2), \
        float(jnp.max(jnp.abs(out - ref)))

    print("KERNEL_OK")
</pallas_src>

<mosaic_0001>
module attributes {stable_mosaic.version = 11 : i64} {
  func.func @_scsa_kernel(%arg0: i32, %arg1: memref<2x32x256xf32, #tpu.memory_space<vmem>>, %arg2: memref<3x8x8xf32, #tpu.memory_space<vmem>>, %arg3: memref<8x8xf32, #tpu.memory_space<vmem>>, %arg4: memref<256x33xf32, #tpu.memory_space<vmem>>, %arg5: memref<32x256xf32, #tpu.memory_space<vmem>>, %arg6: memref<2x16x512xf32, #tpu.memory_space<vmem>>) attributes {dimension_semantics = [#tpu.dimension_semantics<parallel>], iteration_bounds = array<i64: 1>, scalar_prefetch = 0 : i64, scratch_operands = 0 : i64, tpu.core_type = #tpu.core_type<tc>, window_params = [{transform_indices = @transform_0, window_bounds = array<i64: 2, 32, 256>}, {pipeline_mode = #tpu.pipeline_mode<synchronous>, transform_indices = @transform_1, window_bounds = array<i64: 3, 8, 8>}, {pipeline_mode = #tpu.pipeline_mode<synchronous>, transform_indices = @transform_2, window_bounds = array<i64: 8, 8>}, {pipeline_mode = #tpu.pipeline_mode<synchronous>, transform_indices = @transform_3, window_bounds = array<i64: 256, 33>}, {pipeline_mode = #tpu.pipeline_mode<synchronous>, transform_indices = @transform_4, window_bounds = array<i64: 32, 256>}, {transform_indices = @transform_5, window_bounds = array<i64: 2, 16, 512>}]} {
    %c0 = arith.constant 0 : index
    %c0_0 = arith.constant 0 : index
    %c0_1 = arith.constant 0 : index
    %0 = vector.load %arg1[%c0, %c0_0, %c0_1] : memref<2x32x256xf32, #tpu.memory_space<vmem>>, vector<2x32x256xf32>
    %1 = vector.shape_cast %0 : vector<2x32x256xf32> to vector<64x256xf32>
    %c0_2 = arith.constant 0 : index
    %c0_3 = arith.constant 0 : index
    %2 = vector.load %arg4[%c0_2, %c0_3] : memref<256x33xf32, #tpu.memory_space<vmem>>, vector<256x33xf32>
    %cst = arith.constant dense<0.000000e+00> : vector<64x33xf32>
    %3 = tpu.matmul %1, %2, %cst {dimension_numbers = #tpu.dot_dimension_numbers<[1], [0], [0], [1], [0, 0, 1, 1], [], []>} : vector<64x256xf32>, vector<256x33xf32>, vector<64x33xf32> -> vector<64x33xf32>
    %4 = vector.shape_cast %3 : vector<64x33xf32> to vector<4x16x33xf32>
    %5 = vector.extract_strided_slice %4 {offsets = [0, 0, 32], sizes = [4, 8, 1], strides = [1, 1, 1]} : vector<4x16x33xf32> to vector<4x8x1xf32>
    %c0_4 = arith.constant 0 : index
    %c0_5 = arith.constant 0 : index
    %6 = vector.load %arg3[%c0_4, %c0_5] : memref<8x8xf32, #tpu.memory_space<vmem>>, vector<8x1xf32>
    %7 = vector.shape_cast %6 : vector<8x1xf32> to vector<1x8x1xf32>
    %8 = vector.broadcast %7 : vector<1x8x1xf32> to vector<4x8x1xf32>
    %9 = arith.mulf %8, %5 : vector<4x8x1xf32>
    %c0_6 = arith.constant 0 : index
    %c1 = arith.constant 1 : index
    %10 = vector.load %arg3[%c0_6, %c1] : memref<8x8xf32, #tpu.memory_space<vmem>>, vector<8x1xf32>
    %11 = vector.shape_cast %10 : vector<8x1xf32> to vector<1x8x1xf32>
    %12 = vector.broadcast %11 : vector<1x8x1xf32> to vector<4x8x1xf32>
    %13 = arith.addf %9, %12 : vector<4x8x1xf32>
    %14 = arith.negf %13 : vector<4x8x1xf32>
    %15 = math.exp %14 : vector<4x8x1xf32>
    %cst_7 = arith.constant 1.000000e+00 : f32
    %16 = vector.broadcast %cst_7 : f32 to vector<4x8x1xf32>
    %17 = arith.addf %16, %15 : vector<4x8x1xf32>
    %18 = arith.divf %16, %17 : vector<4x8x1xf32>
    %19 = vector.extract_strided_slice %4 {offsets = [0, 8, 0], sizes = [4, 8, 32], strides = [1, 1, 1]} : vector<4x16x33xf32> to vector<4x8x32xf32>
    %20 = vector.extract_strided_slice %4 {offsets = [0, 8, 32], sizes = [4, 8, 1], strides = [1, 1, 1]} : vector<4x16x33xf32> to vector<4x8x1xf32>
    %c0_8 = arith.constant 0 : index
    %c0_9 = arith.constant 0 : index
    %c0_10 = arith.constant 0 : index
    %21 = vector.load %arg2[%c0_8, %c0_9, %c0_10] : memref<3x8x8xf32, #tpu.memory_space<vmem>>, vector<1x8x8xf32>
    %22 = vector.shape_cast %21 : vector<1x8x8xf32> to vector<8x8xf32>
    %23 = vector.shape_cast %22 : vector<8x8xf32> to vector<1x8x8xf32>
    %24 = vector.shape_cast %23 : vector<1x8x8xf32> to vector<1x8x8xf32>
    %25 = vector.broadcast %24 : vector<1x8x8xf32> to vector<4x8x8xf32>
    "tpu.trace_start"() <{level = 10 : i32, message = "boc,bcs->bos"}> : () -> ()
    %cst_11 = arith.constant dense<0.000000e+00> : vector<4x8x32xf32>
    %26 = tpu.matmul %25, %19, %cst_11 {dimension_numbers = #tpu.dot_dimension_numbers<[2], [1], [1], [2], [0, 0, 0, 1, 1, 2], [0], [0]>} : vector<4x8x8xf32>, vector<4x8x32xf32>, vector<4x8x32xf32> -> vector<4x8x32xf32>
    "tpu.trace_stop"() : () -> ()
    %c0_12 = arith.constant 0 : index
    %c2 = arith.constant 2 : index
    %27 = vector.load %arg3[%c0_12, %c2] : memref<8x8xf32, #tpu.memory_space<vmem>>, vector<8x1xf32>
    %28 = vector.shape_cast %27 : vector<8x1xf32> to vector<1x8x1xf32>
    %29 = vector.broadcast %28 : vector<1x8x1xf32> to vector<4x8x32xf32>
    %30 = arith.addf %26, %29 : vector<4x8x32xf32>
    %cst_13 = arith.constant dense<0.000000e+00> : vector<4x8xf32>
    %31 = vector.multi_reduction <add>, %30, %cst_13 [2] : vector<4x8x32xf32> to vector<4x8xf32>
    %32 = vector.shape_cast %31 : vector<4x8xf32> to vector<4x8x1xf32>
    %cst_14 = arith.constant 3.200000e+01 : f32
    %33 = vector.broadcast %cst_14 : f32 to vector<4x8x1xf32>
    %34 = arith.divf %32, %33 : vector<4x8x1xf32>
    %35 = vector.broadcast %34 : vector<4x8x1xf32> to vector<4x8x32xf32>
    %36 = arith.subf %30, %35 : vector<4x8x32xf32>
    %37 = arith.mulf %36, %36 : vector<4x8x32xf32>
    %cst_15 = arith.constant dense<0.000000e+00> : vector<4x8xf32>
    %38 = vector.multi_reduction <add>, %37, %cst_15 [2] : vector<4x8x32xf32> to vector<4x8xf32>
    %39 = vector.shape_cast %38 : vector<4x8xf32> to vector<4x8x1xf32>
    %cst_16 = arith.constant 3.200000e+01 : f32
    %40 = vector.broadcast %cst_16 : f32 to vector<4x8x1xf32>
    %41 = arith.divf %39, %40 : vector<4x8x1xf32>
    %42 = vector.broadcast %34 : vector<4x8x1xf32> to vector<4x8x32xf32>
    %43 = arith.subf %30, %42 : vector<4x8x32xf32>
    %cst_17 = arith.constant 9.99999974E-6 : f32
    %44 = vector.broadcast %cst_17 : f32 to vector<4x8x1xf32>
    %45 = arith.addf %41, %44 : vector<4x8x1xf32>
    %46 = math.rsqrt %45 : vector<4x8x1xf32>
    %47 = vector.broadcast %46 : vector<4x8x1xf32> to vector<4x8x32xf32>
    %48 = arith.mulf %43, %47 : vector<4x8x32xf32>
    %c0_18 = arith.constant 0 : index
    %c3 = arith.constant 3 : index
    %49 = vector.load %arg3[%c0_18, %c3] : memref<8x8xf32, #tpu.memory_space<vmem>>, vector<8x1xf32>
    %50 = vector.shape_cast %49 : vector<8x1xf32> to vector<1x8x1xf32>
    %51 = vector.broadcast %50 : vector<1x8x1xf32> to vector<4x8x32xf32>
    %52 = arith.mulf %48, %51 : vector<4x8x32xf32>
    %c0_19 = arith.constant 0 : index
    %c4 = arith.constant 4 : index
    %53 = vector.load %arg3[%c0_19, %c4] : memref<8x8xf32, #tpu.memory_space<vmem>>, vector<8x1xf32>
    %54 = vector.shape_cast %53 : vector<8x1xf32> to vector<1x8x1xf32>
    %55 = vector.broadcast %54 : vector<1x8x1xf32> to vector<4x8x32xf32>
    %56 = arith.addf %52, %55 : vector<4x8x32xf32>
    %cst_20 = arith.constant 3.000000e+00 : f32
    %57 = vector.broadcast %cst_20 : f32 to vector<4x8x32xf32>
    %58 = arith.addf %56, %57 : vector<4x8x32xf32>
    %cst_21 = arith.constant 0.000000e+00 : f32
    %cst_22 = arith.constant 6.000000e+00 : f32
    %59 = vector.broadcast %cst_21 : f32 to vector<4x8x32xf32>
    %60 = arith.maximumf %59, %58 : vector<4x8x32xf32>
    %61 = vector.broadcast %cst_22 : f32 to vector<4x8x32xf32>
    %62 = arith.minimumf %61, %60 : vector<4x8x32xf32>
    %63 = arith.mulf %56, %62 : vector<4x8x32xf32>
    %cst_23 = arith.constant 0.166666672 : f32
    %64 = vector.broadcast %cst_23 : f32 to vector<4x8x32xf32>
    %65 = arith.mulf %63, %64 : vector<4x8x32xf32>
    %c1_24 = arith.constant 1 : index
    %c0_25 = arith.constant 0 : index
    %c0_26 = arith.constant 0 : index
    %66 = vector.load %arg2[%c1_24, %c0_25, %c0_26] : memref<3x8x8xf32, #tpu.memory_space<vmem>>, vector<1x8x8xf32>
    %67 = vector.shape_cast %66 : vector<1x8x8xf32> to vector<8x8xf32>
    %68 = vector.shape_cast %67 : vector<8x8xf32> to vector<1x8x8xf32>
    %69 = vector.shape_cast %68 : vector<1x8x8xf32> to vector<1x8x8xf32>
    %70 = vector.broadcast %69 : vector<1x8x8xf32> to vector<4x8x8xf32>
    %c2_27 = arith.constant 2 : index
    %c0_28 = arith.constant 0 : index
    %c0_29 = arith.constant 0 : index
    %71 = vector.load %arg2[%c2_27, %c0_28, %c0_29] : memref<3x8x8xf32, #tpu.memory_space<vmem>>, vector<1x8x8xf32>
    %72 = vector.shape_cast %71 : vector<1x8x8xf32> to vector<8x8xf32>
    %73 = vector.shape_cast %72 : vector<8x8xf32> to vector<1x8x8xf32>
    %74 = vector.shape_cast %73 : vector<1x8x8xf32> to vector<1x8x8xf32>
    %75 = vector.broadcast %74 : vector<1x8x8xf32> to vector<4x8x8xf32>
    %76 = vector.extract_strided_slice %65 {offsets = [0, 0, 0], sizes = [4, 8, 16], strides = [1, 1, 1]} : vector<4x8x32xf32> to vector<4x8x16xf32>
    "tpu.trace_start"() <{level = 10 : i32, message = "boc,bch->boh"}> : () -> ()
    %cst_30 = arith.constant dense<0.000000e+00> : vector<4x8x16xf32>
    %77 = tpu.matmul %70, %76, %cst_30 {dimension_numbers = #tpu.dot_dimension_numbers<[2], [1], [1], [2], [0, 0, 0, 1, 1, 2], [0], [0]>} : vector<4x8x8xf32>, vector<4x8x16xf32>, vector<4x8x16xf32> -> vector<4x8x16xf32>
    "tpu.trace_stop"() : () -> ()
    %c0_31 = arith.constant 0 : index
    %c5 = arith.constant 5 : index
    %78 = vector.load %arg3[%c0_31, %c5] : memref<8x8xf32, #tpu.memory_space<vmem>>, vector<8x1xf32>
    %79 = vector.shape_cast %78 : vector<8x1xf32> to vector<1x8x1xf32>
    %80 = vector.broadcast %79 : vector<1x8x1xf32> to vector<4x8x16xf32>
    %81 = arith.addf %77, %80 : vector<4x8x16xf32>
    %82 = vector.extract_strided_slice %65 {offsets = [0, 0, 16], sizes = [4, 8, 16], strides = [1, 1, 1]} : vector<4x8x32xf32> to vector<4x8x16xf32>
    "tpu.trace_start"() <{level = 10 : i32, message = "boc,bcw->bow"}> : () -> ()
    %cst_32 = arith.constant dense<0.000000e+00> : vector<4x8x16xf32>
    %83 = tpu.matmul %75, %82, %cst_32 {dimension_numbers = #tpu.dot_dimension_numbers<[2], [1], [1], [2], [0, 0, 0, 1, 1, 2], [0], [0]>} : vector<4x8x8xf32>, vector<4x8x16xf32>, vector<4x8x16xf32> -> vector<4x8x16xf32>
    "tpu.trace_stop"() : () -> ()
    %c0_33 = arith.constant 0 : index
    %c6 = arith.constant 6 : index
    %84 = vector.load %arg3[%c0_33, %c6] : memref<8x8xf32, #tpu.memory_space<vmem>>, vector<8x1xf32>
    %85 = vector.shape_cast %84 : vector<8x1xf32> to vector<1x8x1xf32>
    %86 = vector.broadcast %85 : vector<1x8x1xf32> to vector<4x8x16xf32>
    %87 = arith.addf %83, %86 : vector<4x8x16xf32>
    %88 = vector.broadcast %20 : vector<4x8x1xf32> to vector<4x8x16xf32>
    %89 = arith.mulf %81, %88 : vector<4x8x16xf32>
    %90 = vector.shape_cast %89 : vector<4x8x16xf32> to vector<2x2x8x16xf32>
    %91 = vector.shape_cast %87 : vector<4x8x16xf32> to vector<2x2x8x16xf32>
    %92 = vector.shape_cast %18 : vector<4x8x1xf32> to vector<2x2x8x1xf32>
    %c0_34 = arith.constant 0 : index
    %c0_35 = arith.constant 0 : index
    %93 = vector.load %arg5[%c0_34, %c0_35] : memref<32x256xf32, #tpu.memory_space<vmem>>, vector<16x256xf32>
    %c16 = arith.constant 16 : index
    %c0_36 = arith.constant 0 : index
    %94 = vector.load %arg5[%c16, %c0_36] : memref<32x256xf32, #tpu.memory_space<vmem>>, vector<16x256xf32>
    %c0_37 = arith.constant 0 : index
    %c0_38 = arith.constant 0 : index
    %c0_39 = arith.constant 0 : index
    %95 = vector.load %arg1[%c0_37, %c0_38, %c0_39] : memref<2x32x256xf32, #tpu.memory_space<vmem>>, vector<2x8x256xf32>
    %96 = vector.extract_strided_slice %92 {offsets = [0, 0, 0, 0], sizes = [2, 1, 8, 1], strides = [1, 1, 1, 1]} : vector<2x2x8x1xf32> to vector<2x1x8x1xf32>
    %97 = vector.shape_cast %96 : vector<2x1x8x1xf32> to vector<2x8x1xf32>
    %98 = vector.broadcast %97 : vector<2x8x1xf32> to vector<2x8x256xf32>
    %99 = arith.mulf %95, %98 : vector<2x8x256xf32>
    %c0_40 = arith.constant 0 : index
    %c0_41 = arith.constant 0 : index
    %c0_42 = arith.constant 0 : index
    %100 = vector.load %arg6[%c0_40, %c0_41, %c0_42] : memref<2x16x512xf32, #tpu.memory_space<vmem>>, vector<2x8x256xf32>
    tpu.vector_store %arg6[%c0_40, %c0_41, %c0_42], %99 {strides = array<i32>} : memref<2x16x512xf32, #tpu.memory_space<vmem>>, vector<2x8x256xf32>,
    %101 = vector.extract_strided_slice %90 {offsets = [0, 0, 0, 0], sizes = [2, 1, 8, 16], strides = [1, 1, 1, 1]} : vector<2x2x8x16xf32> to vector<2x1x8x16xf32>
    %102 = vector.shape_cast %101 : vector<2x1x8x16xf32> to vector<2x8x16xf32>
    %103 = vector.shape_cast %102 : vector<2x8x16xf32> to vector<16x16xf32>
    %cst_43 = arith.constant dense<0.000000e+00> : vector<16x256xf32>
    %104 = tpu.matmul %103, %93, %cst_43 {dimension_numbers = #tpu.dot_dimension_numbers<[1], [0], [0], [1], [0, 0, 1, 1], [], []>} : vector<16x16xf32>, vector<16x256xf32>, vector<16x256xf32> -> vector<16x256xf32>
    %105 = vector.extract_strided_slice %91 {offsets = [0, 0, 0, 0], sizes = [2, 1, 8, 16], strides = [1, 1, 1, 1]} : vector<2x2x8x16xf32> to vector<2x1x8x16xf32>
    %106 = vector.shape_cast %105 : vector<2x1x8x16xf32> to vector<2x8x16xf32>
    %107 = vector.shape_cast %106 : vector<2x8x16xf32> to vector<16x16xf32>
    %cst_44 = arith.constant dense<0.000000e+00> : vector<16x256xf32>
    %108 = tpu.matmul %107, %94, %cst_44 {dimension_numbers = #tpu.dot_dimension_numbers<[1], [0], [0], [1], [0, 0, 1, 1], [], []>} : vector<16x16xf32>, vector<16x256xf32>, vector<16x256xf32> -> vector<16x256xf32>
    %109 = arith.mulf %104, %108 : vector<16x256xf32>
    %110 = vector.shape_cast %109 : vector<16x256xf32> to vector<2x8x256xf32>
    %c0_45 = arith.constant 0 : index
    %c8 = arith.constant 8 : index
    %c0_46 = arith.constant 0 : index
    %111 = vector.load %arg1[%c0_45, %c8, %c0_46] : memref<2x32x256xf32, #tpu.memory_space<vmem>>, vector<2x8x256xf32>
    %112 = arith.negf %110 : vector<2x8x256xf32>
    %113 = math.exp %112 : vector<2x8x256xf32>
    %cst_47 = arith.constant 1.000000e+00 : f32
    %114 = vector.broadcast %cst_47 : f32 to vector<2x8x256xf32>
    %115 = arith.addf %114, %113 : vector<2x8x256xf32>
    %116 = arith.divf %114, %115 : vector<2x8x256xf32>
    %117 = arith.mulf %111, %116 : vector<2x8x256xf32>
    %c0_48 = arith.constant 0 : index
    %c8_49 = arith.constant 8 : index
    %c0_50 = arith.constant 0 : index
    %118 = vector.load %arg6[%c0_48, %c8_49, %c0_50] : memref<2x16x512xf32, #tpu.memory_space<vmem>>, vector<2x8x256xf32>
    tpu.vector_store %arg6[%c0_48, %c8_49, %c0_50], %117 {strides = array<i32>} : memref<2x16x512xf32, #tpu.memory_space<vmem>>, vector<2x8x256xf32>,
    %c0_51 = arith.constant 0 : index
    %c16_52 = arith.constant 16 : index
    %c0_53 = arith.constant 0 : index
    %119 = vector.load %arg1[%c0_51, %c16_52, %c0_53] : memref<2x32x256xf32, #tpu.memory_space<vmem>>, vector<2x8x256xf32>
    %120 = vector.extract_strided_slice %92 {offsets = [0, 1, 0, 0], sizes = [2, 1, 8, 1], strides = [1, 1, 1, 1]} : vector<2x2x8x1xf32> to vector<2x1x8x1xf32>
    %121 = vector.shape_cast %120 : vector<2x1x8x1xf32> to vector<2x8x1xf32>
    %122 = vector.broadcast %121 : vector<2x8x1xf32> to vector<2x8x256xf32>
    %123 = arith.mulf %119, %122 : vector<2x8x256xf32>
    %c0_54 = arith.constant 0 : index
    %c0_55 = arith.constant 0 : index
    %c256 = arith.constant 256 : index
    %124 = vector.load %arg6[%c0_54, %c0_55, %c256] : memref<2x16x512xf32, #tpu.memory_space<vmem>>, vector<2x8x256xf32>
    tpu.vector_store %arg6[%c0_54, %c0_55, %c256], %123 {strides = array<i32>} : memref<2x16x512xf32, #tpu.memory_space<vmem>>, vector<2x8x256xf32>,
    %125 = vector.extract_strided_slice %90 {offsets = [0, 1, 0, 0], sizes = [2, 1, 8, 16], strides = [1, 1, 1, 1]} : vector<2x2x8x16xf32> to vector<2x1x8x16xf32>
    %126 = vector.shape_cast %125 : vector<2x1x8x16xf32> to vector<2x8x16xf32>
    %127 = vector.shape_cast %126 : vector<2x8x16xf32> to vector<16x16xf32>
    %cst_56 = arith.constant dense<0.000000e+00> : vector<16x256xf32>
    %128 = tpu.matmul %127, %93, %cst_56 {dimension_numbers = #tpu.dot_dimension_numbers<[1], [0], [0], [1], [0, 0, 1, 1], [], []>} : vector<16x16xf32>, vector<16x256xf32>, vector<16x256xf32> -> vector<16x256xf32>
    %129 = vector.extract_strided_slice %91 {offsets = [0, 1, 0, 0], sizes = [2, 1, 8, 16], strides = [1, 1, 1, 1]} : vector<2x2x8x16xf32> to vector<2x1x8x16xf32>
    %130 = vector.shape_cast %129 : vector<2x1x8x16xf32> to vector<2x8x16xf32>
    %131 = vector.shape_cast %130 : vector<2x8x16xf32> to vector<16x16xf32>
    %cst_57 = arith.constant dense<0.000000e+00> : vector<16x256xf32>
    %132 = tpu.matmul %131, %94, %cst_57 {dimension_numbers = #tpu.dot_dimension_numbers<[1], [0], [0], [1], [0, 0, 1, 1], [], []>} : vector<16x16xf32>, vector<16x256xf32>, vector<16x256xf32> -> vector<16x256xf32>
    %133 = arith.mulf %128, %132 : vector<16x256xf32>
    %134 = vector.shape_cast %133 : vector<16x256xf32> to vector<2x8x256xf32>
    %c0_58 = arith.constant 0 : index
    %c24 = arith.constant 24 : index
    %c0_59 = arith.constant 0 : index
    %135 = vector.load %arg1[%c0_58, %c24, %c0_59] : memref<2x32x256xf32, #tpu.memory_space<vmem>>, vector<2x8x256xf32>
    %136 = arith.negf %134 : vector<2x8x256xf32>
    %137 = math.exp %136 : vector<2x8x256xf32>
    %cst_60 = arith.constant 1.000000e+00 : f32
    %138 = vector.broadcast %cst_60 : f32 to vector<2x8x256xf32>
    %139 = arith.addf %138, %137 : vector<2x8x256xf32>
    %140 = arith.divf %138, %139 : vector<2x8x256xf32>
    %141 = arith.mulf %135, %140 : vector<2x8x256xf32>
    %c0_61 = arith.constant 0 : index
    %c8_62 = arith.constant 8 : index
    %c256_63 = arith.constant 256 : index
    %142 = vector.load %arg6[%c0_61, %c8_62, %c256_63] : memref<2x16x512xf32, #tpu.memory_space<vmem>>, vector<2x8x256xf32>
    tpu.vector_store %arg6[%c0_61, %c8_62, %c256_63], %141 {strides = array<i32>} : memref<2x16x512xf32, #tpu.memory_space<vmem>>, vector<2x8x256xf32>,
    return
  }
  func.func @transform_0(%arg0: i32) -> (i32, i32, i32) {
    %c0_i32 = arith.constant 0 : i32
    %c0_i32_0 = arith.constant 0 : i32
    %c0_i32_1 = arith.constant 0 : i32
    return %arg0, %c0_i32, %c0_i32_0 : i32, i32, i32
  }
  func.func @transform_1(%arg0: i32) -> (i32, i32, i32) {
    %c0_i32 = arith.constant 0 : i32
    %c0_i32_0 = arith.constant 0 : i32
    %c0_i32_1 = arith.constant 0 : i32
    %c0_i32_2 = arith.constant 0 : i32
    return %c0_i32, %c0_i32_0, %c0_i32_1 : i32, i32, i32
  }
  func.func @transform_2(%arg0: i32) -> (i32, i32) {
    %c0_i32 = arith.constant 0 : i32
    %c0_i32_0 = arith.constant 0 : i32
    %c0_i32_1 = arith.constant 0 : i32
    return %c0_i32, %c0_i32_0 : i32, i32
  }
  func.func @transform_3(%arg0: i32) -> (i32, i32) {
    %c0_i32 = arith.constant 0 : i32
    %c0_i32_0 = arith.constant 0 : i32
    %c0_i32_1 = arith.constant 0 : i32
    return %c0_i32, %c0_i32_0 : i32, i32
  }
  func.func @transform_4(%arg0: i32) -> (i32, i32) {
    %c0_i32 = arith.constant 0 : i32
    %c0_i32_0 = arith.constant 0 : i32
    %c0_i32_1 = arith.constant 0 : i32
    return %c0_i32, %c0_i32_0 : i32, i32
  }
  func.func @transform_5(%arg0: i32) -> (i32, i32, i32) {
    %c0_i32 = arith.constant 0 : i32
    %c0_i32_0 = arith.constant 0 : i32
    %c0_i32_1 = arith.constant 0 : i32
    return %arg0, %c0_i32, %c0_i32_0 : i32, i32, i32
  }
}

</mosaic_0001>

<llo_original>
// kernel: tpu_custom_call.1
$region0: #{tpu_custom_call.1}
  #allocation0 [shape = 'u32[]', space=smem, size = 0x4, offset = 0x4, fixed_abs, tag = 'smem constant byte address 0x4 - core index']
  #allocation1 [shape = 'u32[72,128]{1,0:T(1,128)}', space=vmem, size = 0x9000, scoped, tag = 'internal scratch']
  %s0 = inlined_call_operand.vmem [shape: f32[2,32,256], index: 0, kind: input, shape index: {}]
  %s1 = inlined_call_operand.vmem [shape: f32[3,8,8], index: 1, kind: input, shape index: {}]
  %s2 = inlined_call_operand.vmem [shape: f32[8,8], index: 2, kind: input, shape index: {}]
  %s3 = inlined_call_operand.vmem [shape: f32[256,33], index: 3, kind: input, shape index: {}]
  %s4 = inlined_call_operand.vmem [shape: f32[32,256], index: 4, kind: input, shape index: {}]
  %s5 = inlined_call_operand.hbm [shape: f32[2,16,512], index: 5, kind: output, shape index: {}]
  %s6 = sld [smem:[#allocation0]]
  $region30: #{tpu_custom_call.1} parent=0
    _
  %s8 = ssub.s32 1, %s6
  %s9 = scalar_select 0, %s8, %s6
  $region1: #{tpu_custom_call.1} parent=0
    #allocation2 [shape = 'u8[65536]{0}', space=vmem, size = 0x10000, scoped, tag = 'output window, operand 0, single buffered']
    #allocation3 [shape = 's32[1]{0}', space=sflag, size = 0x4, scoped, tag = 'scoped memory for tpu_custom_call.1']
    %10 = vsyncpa [#allocation3], 0
    // Predicated region
    $region2: #{tpu_custom_call.1} parent=1 // pred_check
      _
    $region3: #{tpu_custom_call.1} parent=1 // pred_check_branch
      %12 = sbr.rel (0) target = $region5
    $region4: #{tpu_custom_call.1} parent=1 // pred_region
      _
    $region5: #{tpu_custom_call.1} parent=1 // pred_fallthru
      _
    // Predicated region
    $region6: #{tpu_custom_call.1} parent=1 // pred_check
      _
    $region7: #{tpu_custom_call.1} parent=1 // pred_check_branch
      %14 = sbr.rel (0) target = $region9
    $region8: #{tpu_custom_call.1} parent=1 // pred_region
      _
    $region9: #{tpu_custom_call.1} parent=1 // pred_fallthru
      _
    // Predicated region
    $region10: #{tpu_custom_call.1} parent=1 // pred_check
      _
    $region11: #{tpu_custom_call.1} parent=1 // pred_check_branch
      %16 = sbr.rel (0) target = $region13
    $region12: #{tpu_custom_call.1} parent=1 // pred_region
      _
    $region13: #{tpu_custom_call.1} parent=1 // pred_fallthru
      _
    // Predicated region
    $region14: #{tpu_custom_call.1} parent=1 // pred_check
      _
    $region15: #{tpu_custom_call.1} parent=1 // pred_check_branch
      %18 = sbr.rel (0) target = $region17
    $region16: #{tpu_custom_call.1} parent=1 // pred_region
      _
    $region17: #{tpu_custom_call.1} parent=1 // pred_fallthru
      _
    // Predicated region
    $region18: #{tpu_custom_call.1} parent=1 // pred_check
      _
    $region19: #{tpu_custom_call.1} parent=1 // pred_check_branch
      %20 = sbr.rel (0) target = $region21
    $region20: #{tpu_custom_call.1} parent=1 // pred_region
      _
    $region21: #{tpu_custom_call.1} parent=1 // pred_fallthru
      _
    %v21 = vld [vmem:[%s0] sm:$0xff]
    %v22 = vld [vmem:[%s0 + $0x8] sm:$0xff]
    %v23 = vld [vmem:[%s0 + $0x10] sm:$0xff]
    %v24 = vld [vmem:[%s0 + $0x18] sm:$0xff]
    %v25 = vld [vmem:[%s0 + $0x20] sm:$0xff]
    %v26 = vld [vmem:[%s0 + $0x28] sm:$0xff]
    %v27 = vld [vmem:[%s0 + $0x30] sm:$0xff]
    %v28 = vld [vmem:[%s0 + $0x38] sm:$0xff]
    %v29 = vld [vmem:[%s0 + $0x40] sm:$0xff]
    %v30 = vld [vmem:[%s0 + $0x48] sm:$0xff]
    %v31 = vld [vmem:[%s0 + $0x50] sm:$0xff]
    %v32 = vld [vmem:[%s0 + $0x58] sm:$0xff]
    %v33 = vld [vmem:[%s0 + $0x60] sm:$0xff]
    %v34 = vld [vmem:[%s0 + $0x68] sm:$0xff]
    %v35 = vld [vmem:[%s0 + $0x70] sm:$0xff]
    %v36 = vld [vmem:[%s0 + $0x78] sm:$0xff]
    %v37 = vld [vmem:[%s3] sm:$0xff]
    %v38 = vld [vmem:[%s3 + $0x8] sm:$0xff]
    %v39 = vld [vmem:[%s3 + $0x10] sm:$0xff]
    %v40 = vld [vmem:[%s3 + $0x18] sm:$0xff]
    %v41 = vld [vmem:[%s3 + $0x20] sm:$0xff]
    %v42 = vld [vmem:[%s3 + $0x28] sm:$0xff]
    %v43 = vld [vmem:[%s3 + $0x30] sm:$0xff]
    %v44 = vld [vmem:[%s3 + $0x38] sm:$0xff]
    %v45 = vld [vmem:[%s3 + $0x40] sm:$0xff]
    %v46 = vld [vmem:[%s3 + $0x48] sm:$0xff]
    %v47 = vld [vmem:[%s3 + $0x50] sm:$0xff]
    %v48 = vld [vmem:[%s3 + $0x58] sm:$0xff]
    %v49 = vld [vmem:[%s3 + $0x60] sm:$0xff]
    %v50 = vld [vmem:[%s3 + $0x68] sm:$0xff]
    %v51 = vld [vmem:[%s3 + $0x70] sm:$0xff]
    %v52 = vld [vmem:[%s3 + $0x78] sm:$0xff]
    %v53 = vld [vmem:[%s3 + $0x80] sm:$0xff]
    %v54 = vld [vmem:[%s3 + $0x88] sm:$0xff]
    %v55 = vld [vmem:[%s3 + $0x90] sm:$0xff]
    %v56 = vld [vmem:[%s3 + $0x98] sm:$0xff]
    %v57 = vld [vmem:[%s3 + $0xa0] sm:$0xff]
    %v58 = vld [vmem:[%s3 + $0xa8] sm:$0xff]
    %v59 = vld [vmem:[%s3 + $0xb0] sm:$0xff]
    %v60 = vld [vmem:[%s3 + $0xb8] sm:$0xff]
    %v61 = vld [vmem:[%s3 + $0xc0] sm:$0xff]
    %v62 = vld [vmem:[%s3 + $0xc8] sm:$0xff]
    %v63 = vld [vmem:[%s3 + $0xd0] sm:$0xff]
    %v64 = vld [vmem:[%s3 + $0xd8] sm:$0xff]
    %v65 = vld [vmem:[%s3 + $0xe0] sm:$0xff]
    %v66 = vld [vmem:[%s3 + $0xe8] sm:$0xff]
    %v67 = vld [vmem:[%s3 + $0xf0] sm:$0xff]
    %v68 = vld [vmem:[%s3 + $0xf8] sm:$0xff]
    %69 = vmatpush.msra.mxu0 %v52
    %70 = vmatpush.msra.mxu0 %v51
    %71 = vmatpush.msra.mxu0 %v50
    %72 = vmatpush.msra.mxu0 %v49
    %73 = vmatpush.msra.mxu0 %v48
    %74 = vmatpush.msra.mxu0 %v47
    %75 = vmatpush.msra.mxu0 %v46
    %76 = vmatpush.msra.mxu0 %v45
    %77 = vmatpush.msra.mxu0 %v44
    %78 = vmatpush.msra.mxu0 %v43
    %79 = vmatpush.msra.mxu0 %v42
    %80 = vmatpush.msra.mxu0 %v41
    %81 = vmatpush.msra.mxu0 %v40
    %82 = vmatpush.msra.mxu0 %v39
    %83 = vmatpush.msra.mxu0 %v38
    %84 = vmatpush.msra.mxu0 %v37
    %85 = vmatmul.f32.gmra.mxu0 %v21
    %v86 = vpop.f32.mrf.mxu0
    %v87 = vadd.f32 0.0, %v86
    %88 = vmatmul.f32.gmra.mxu0 %v23
    %v89 = vpop.f32.mrf.mxu0
    %v90 = vadd.f32 0.0, %v89
    %91 = vmatmul.f32.gmra.mxu0 %v25
    %v92 = vpop.f32.mrf.mxu0
    %v93 = vadd.f32 0.0, %v92
    %94 = vmatmul.f32.gmra.mxu0 %v27
    %v95 = vpop.f32.mrf.mxu0
    %v96 = vadd.f32 0.0, %v95
    %97 = vmatmul.f32.gmra.mxu0 %v29
    %v98 = vpop.f32.mrf.mxu0
    %v99 = vadd.f32 0.0, %v98
    %100 = vmatmul.f32.gmra.mxu0 %v31
    %v101 = vpop.f32.mrf.mxu0
    %v102 = vadd.f32 0.0, %v101
    %103 = vmatmul.f32.gmra.mxu0 %v33
    %v104 = vpop.f32.mrf.mxu0
    %v105 = vadd.f32 0.0, %v104
    %106 = vmatmul.f32.gmra.mxu0 %v35
    %v107 = vpop.f32.mrf.mxu0
    %v108 = vadd.f32 0.0, %v107
    %109 = vdwg.mxu0
    %110 = vmatpush.msra.mxu0 %v68
    %111 = vmatpush.msra.mxu0 %v67
    %112 = vmatpush.msra.mxu0 %v66
    %113 = vmatpush.msra.mxu0 %v65
    %114 = vmatpush.msra.mxu0 %v64
    %115 = vmatpush.msra.mxu0 %v63
    %116 = vmatpush.msra.mxu0 %v62
    %117 = vmatpush.msra.mxu0 %v61
    %118 = vmatpush.msra.mxu0 %v60
    %119 = vmatpush.msra.mxu0 %v59
    %120 = vmatpush.msra.mxu0 %v58
    %121 = vmatpush.msra.mxu0 %v57
    %122 = vmatpush.msra.mxu0 %v56
    %123 = vmatpush.msra.mxu0 %v55
    %124 = vmatpush.msra.mxu0 %v54
    %125 = vmatpush.msra.mxu0 %v53
    %126 = vmatmul.f32.gmra.mxu0 %v22
    %v127 = vpop.f32.mrf.mxu0
    %v128 = vadd.f32 %v87, %v127
    %129 = vmatmul.f32.gmra.mxu0 %v24
    %v130 = vpop.f32.mrf.mxu0
    %v131 = vadd.f32 %v90, %v130
    %132 = vmatmul.f32.gmra.mxu0 %v26
    %v133 = vpop.f32.mrf.mxu0
    %v134 = vadd.f32 %v93, %v133
    %135 = vmatmul.f32.gmra.mxu0 %v28
    %v136 = vpop.f32.mrf.mxu0
    %v137 = vadd.f32 %v96, %v136
    %138 = vmatmul.f32.gmra.mxu0 %v30
    %v139 = vpop.f32.mrf.mxu0
    %v140 = vadd.f32 %v99, %v139
    %141 = vmatmul.f32.gmra.mxu0 %v32
    %v142 = vpop.f32.mrf.mxu0
    %v143 = vadd.f32 %v102, %v142
    %144 = vmatmul.f32.gmra.mxu0 %v34
    %v145 = vpop.f32.mrf.mxu0
    %v146 = vadd.f32 %v105, %v145
    %147 = vmatmul.f32.gmra.mxu0 %v36
    %v148 = vpop.f32.mrf.mxu0
    %v149 = vadd.f32 %v108, %v148
    %150 = vdwg.mxu0
    %v151 = vld [vmem:[%s2] sm:$0xff]
    %156 = vrot.lane.b32.xlu0 %v128, 96
    %v157 = vpop.permute.xlu0 %156
    %158 = vrot.lane.b32.xlu0 %v134, 96
    %v159 = vpop.permute.xlu0 %158
    %160 = vrot.lane.b32.xlu0 %v140, 96
    %v161 = vpop.permute.xlu0 %160
    %162 = vrot.lane.b32.xlu0 %v146, 96
    %v163 = vpop.permute.xlu0 %162
    %v168 = vmul.f32 %v151, %v157
    %v169 = vmul.f32 %v151, %v159
    %v170 = vmul.f32 %v151, %v161
    %v171 = vmul.f32 %v151, %v163
    %173 = vrot.lane.b32.xlu0 %v151, 127
    %v174 = vpop.permute.xlu0 %173
    %v176 = vadd.f32 %v168, %v174
    %v177 = vadd.f32 %v169, %v174
    %v178 = vadd.f32 %v170, %v174
    %v179 = vadd.f32 %v171, %v174
    %v180 = vxor.u32 %v176, 2147483648
    %v181 = vxor.u32 %v177, 2147483648
    %v182 = vxor.u32 %v178, 2147483648
    %v183 = vxor.u32 %v179, 2147483648
    %v184 = vmul.f32 %v180, 1.442695
    %v185 = vpow.pop %v184
    %v186 = vmul.f32 %v181, 1.442695
    %v187 = vpow.pop %v186
    %v188 = vmul.f32 %v182, 1.442695
    %v189 = vpow.pop %v188
    %v190 = vmul.f32 %v183, 1.442695
    %v191 = vpow.pop %v190
    %v192 = vadd.f32 %v185, 1.0
    %v193 = vadd.f32 %v187, 1.0
    %v194 = vadd.f32 %v189, 1.0
    %v195 = vadd.f32 %v191, 1.0
    %v196 = vrcp.pop %v192
    %v197 = vmul.f32 %v192, %v196
    %v198 = vsub.f32 1.0, %v197
    %v199 = vmul.f32 %v196, %v198
    %v200 = vadd.f32 %v196, %v199
    %vm201 = vweird.f32 %v192
    %vm202 = vweird.f32 %v196
    %vm203 = vmor %vm201, %vm202
    %v204 = vsel %vm203, %v196, %v200
    %v205 = vand.u32 2147483647, %v192
    %vm206 = vcmp.eq.f32.partialorder %v205, 8.507059e+37
    %v207 = vand.u32 %v192, 2147483648
    %v208 = vor.u32 1.1754944e-38, %v207
    %v209 = vsel %vm206, %v208, %v204
    %v210 = vmul.f32 1.0, %v209
    %v211 = vrcp.pop %v193
    %v212 = vmul.f32 %v193, %v211
    %v213 = vsub.f32 1.0, %v212
    %v214 = vmul.f32 %v211, %v213
    %v215 = vadd.f32 %v211, %v214
    %vm216 = vweird.f32 %v193
    %vm217 = vweird.f32 %v211
    %vm218 = vmor %vm216, %vm217
    %v219 = vsel %vm218, %v211, %v215
    %v220 = vand.u32 2147483647, %v193
    %vm221 = vcmp.eq.f32.partialorder %v220, 8.507059e+37
    %v222 = vand.u32 %v193, 2147483648
    %v223 = vor.u32 1.1754944e-38, %v222
    %v224 = vsel %vm221, %v223, %v219
    %v225 = vmul.f32 1.0, %v224
    %v226 = vrcp.pop %v194
    %v227 = vmul.f32 %v194, %v226
    %v228 = vsub.f32 1.0, %v227
    %v229 = vmul.f32 %v226, %v228
    %v230 = vadd.f32 %v226, %v229
    %vm231 = vweird.f32 %v194
    %vm232 = vweird.f32 %v226
    %vm233 = vmor %vm231, %vm232
    %v234 = vsel %vm233, %v226, %v230
    %v235 = vand.u32 2147483647, %v194
    %vm236 = vcmp.eq.f32.partialorder %v235, 8.507059e+37
    %v237 = vand.u32 %v194, 2147483648
    %v238 = vor.u32 1.1754944e-38, %v237
    %v239 = vsel %vm236, %v238, %v234
    %v240 = vmul.f32 1.0, %v239
    %v241 = vrcp.pop %v195
    %v242 = vmul.f32 %v195, %v241
    %v243 = vsub.f32 1.0, %v242
    %v244 = vmul.f32 %v241, %v243
    %v245 = vadd.f32 %v241, %v244
    %vm246 = vweird.f32 %v195
    %vm247 = vweird.f32 %v241
    %vm248 = vmor %vm246, %vm247
    %v249 = vsel %vm248, %v241, %v245
    %v250 = vand.u32 2147483647, %v195
    %vm251 = vcmp.eq.f32.partialorder %v250, 8.507059e+37
    %v252 = vand.u32 %v195, 2147483648
    %v253 = vor.u32 1.1754944e-38, %v252
    %v254 = vsel %vm251, %v253, %v249
    %v255 = vmul.f32 1.0, %v254
    %v256 = vld [vmem:[%s1] sm:$0xff]
    %v257 = vld [vmem:[%s2] sm:$0xff]
    %259 = vset.pattern.permute.xlu0 2
    %260 = vperm.xlu0 %259, %v257
    %v261 = vpop.permute.xlu0 %260
    %vm263 = vcmask 64512
    %v265 = vsel %vm263, %v256, 0
    %267 = vmatpush.msra.mxu0 0.0
    %268 = vmatpush.msra.mxu0 0.0
    %269 = vmatpush.msra.mxu0 0.0
    %270 = vmatpush.msra.mxu0 0.0
    %271 = vmatpush.msra.mxu0 0.0
    %272 = vmatpush.msra.mxu0 0.0
    %273 = vmatpush.msra.mxu0 0.0
    %274 = vmatpush.msra.mxu0 0.0
    %275 = vmatpush.msra.mxu0 0.0
    %276 = vmatpush.msra.mxu0 0.0
    %277 = vmatpush.msra.mxu0 0.0
    %278 = vmatpush.msra.mxu0 0.0
    %279 = vmatpush.msra.mxu0 0.0
    %280 = vmatpush.msra.mxu0 0.0
    %281 = vmatpush.msra.mxu0 0.0
    %282 = vmatpush.msra.mxu0 %v131
    %283 = vmatmul.f32.gmra.mxu0 %v265
    %v284 = vpop.f32.mrf.mxu0
    %v285 = vadd.f32 %v261, %v284
    %286 = vdwg.mxu0
    %287 = vmatpush.msra.mxu0 0.0
    %288 = vmatpush.msra.mxu0 0.0
    %289 = vmatpush.msra.mxu0 0.0
    %290 = vmatpush.msra.mxu0 0.0
    %291 = vmatpush.msra.mxu0 0.0
    %292 = vmatpush.msra.mxu0 0.0
    %293 = vmatpush.msra.mxu0 0.0
    %294 = vmatpush.msra.mxu0 0.0
    %295 = vmatpush.msra.mxu0 0.0
    %296 = vmatpush.msra.mxu0 0.0
    %297 = vmatpush.msra.mxu0 0.0
    %298 = vmatpush.msra.mxu0 0.0
    %299 = vmatpush.msra.mxu0 0.0
    %300 = vmatpush.msra.mxu0 0.0
    %301 = vmatpush.msra.mxu0 0.0
    %302 = vmatpush.msra.mxu0 %v137
    %303 = vmatmul.f32.gmra.mxu0 %v265
    %v304 = vpop.f32.mrf.mxu0
    %v305 = vadd.f32 %v261, %v304
    %306 = vdwg.mxu0
    %307 = vmatpush.msra.mxu0 0.0
    %308 = vmatpush.msra.mxu0 0.0
    %309 = vmatpush.msra.mxu0 0.0
    %310 = vmatpush.msra.mxu0 0.0
    %311 = vmatpush.msra.mxu0 0.0
    %312 = vmatpush.msra.mxu0 0.0
    %313 = vmatpush.msra.mxu0 0.0
    %314 = vmatpush.msra.mxu0 0.0
    %315 = vmatpush.msra.mxu0 0.0
    %316 = vmatpush.msra.mxu0 0.0
    %317 = vmatpush.msra.mxu0 0.0
    %318 = vmatpush.msra.mxu0 0.0
    %319 = vmatpush.msra.mxu0 0.0
    %320 = vmatpush.msra.mxu0 0.0
    %321 = vmatpush.msra.mxu0 0.0
    %322 = vmatpush.msra.mxu0 %v143
    %323 = vmatmul.f32.gmra.mxu0 %v265
    %v324 = vpop.f32.mrf.mxu0
    %v325 = vadd.f32 %v261, %v324
    %326 = vdwg.mxu0
    %327 = vmatpush.msra.mxu0 0.0
    %328 = vmatpush.msra.mxu0 0.0
    %329 = vmatpush.msra.mxu0 0.0
    %330 = vmatpush.msra.mxu0 0.0
    %331 = vmatpush.msra.mxu0 0.0
    %332 = vmatpush.msra.mxu0 0.0
    %333 = vmatpush.msra.mxu0 0.0
    %334 = vmatpush.msra.mxu0 0.0
    %335 = vmatpush.msra.mxu0 0.0
    %336 = vmatpush.msra.mxu0 0.0
    %337 = vmatpush.msra.mxu0 0.0
    %338 = vmatpush.msra.mxu0 0.0
    %339 = vmatpush.msra.mxu0 0.0
    %340 = vmatpush.msra.mxu0 0.0
    %341 = vmatpush.msra.mxu0 0.0
    %342 = vmatpush.msra.mxu0 %v149
    %343 = vmatmul.f32.gmra.mxu0 %v265
    %v344 = vpop.f32.mrf.mxu0
    %v345 = vadd.f32 %v261, %v344
    %346 = vdwg.mxu0
    %vm347 = vcmask 261120
    %v348 = vsel %vm347, %v285, 0.0
    %349 = vadd.xlane.f32.xlu0 %v348
    %v350 = vpop.xlane.xlu0 %349
    %v351 = vsel %vm347, %v305, 0.0
    %352 = vadd.xlane.f32.xlu0 %v351
    %v353 = vpop.xlane.xlu0 %352
    %v354 = vsel %vm347, %v325, 0.0
    %355 = vadd.xlane.f32.xlu0 %v354
    %v356 = vpop.xlane.xlu0 %355
    %v357 = vsel %vm347, %v345, 0.0
    %358 = vadd.xlane.f32.xlu0 %v357
    %v359 = vpop.xlane.xlu0 %358
    %v360 = vrcp.pop 32.0
    %v361 = vmul.f32 32.0, %v360
    %v362 = vsub.f32 1.0, %v361
    %v363 = vmul.f32 %v360, %v362
    %v364 = vadd.f32 %v360, %v363
    %vm365 = vweird.f32 %v360
    %v366 = vsel %vm365, %v360, %v364
    %v367 = vmul.f32 %v350, %v366
    %v368 = vmul.f32 %v353, %v366
    %v369 = vmul.f32 %v356, %v366
    %v370 = vmul.f32 %v359, %v366
    %v371 = vsub.f32 %v285, %v367
    %v372 = vsub.f32 %v305, %v368
    %v373 = vsub.f32 %v325, %v369
    %v374 = vsub.f32 %v345, %v370
    %v375 = vmul.f32 %v371, %v371
    %v376 = vmul.f32 %v372, %v372
    %v377 = vmul.f32 %v373, %v373
    %v378 = vmul.f32 %v374, %v374
    %v379 = vsel %vm347, %v375, 0.0
    %380 = vadd.xlane.f32.xlu0 %v379
    %v381 = vpop.xlane.xlu0 %380
    %v382 = vsel %vm347, %v376, 0.0
    %383 = vadd.xlane.f32.xlu0 %v382
    %v384 = vpop.xlane.xlu0 %383
    %v385 = vsel %vm347, %v377, 0.0
    %386 = vadd.xlane.f32.xlu0 %v385
    %v387 = vpop.xlane.xlu0 %386
    %v388 = vsel %vm347, %v378, 0.0
    %389 = vadd.xlane.f32.xlu0 %v388
    %v390 = vpop.xlane.xlu0 %389
    %v391 = vmul.f32 %v381, %v366
    %v392 = vmul.f32 %v384, %v366
    %v393 = vmul.f32 %v387, %v366
    %v394 = vmul.f32 %v390, %v366
    %v395 = vadd.f32 %v391, 1e-05
    %v396 = vadd.f32 %v392, 1e-05
    %v397 = vadd.f32 %v393, 1e-05
    %v398 = vadd.f32 %v394, 1e-05
    %v399 = vrsqrt.pop %v395
    %v400 = vmul.f32 %v399, %v395
    %v401 = vmul.f32 %v400, %v399
    %v402 = vmul.f32 0.5, %v401
    %v403 = vsub.f32 1.5, %v402
    %v404 = vmul.f32 %v399, %v403
    %vm405 = vweird.f32 %v395
    %vm406 = vweird.f32 %v399
    %vm407 = vmor %vm405, %vm406
    %v408 = vsel %vm407, %v399, %v404
    %v409 = vrsqrt.pop %v396
    %v410 = vmul.f32 %v409, %v396
    %v411 = vmul.f32 %v410, %v409
    %v412 = vmul.f32 0.5, %v411
    %v413 = vsub.f32 1.5, %v412
    %v414 = vmul.f32 %v409, %v413
    %vm415 = vweird.f32 %v396
    %vm416 = vweird.f32 %v409
    %vm417 = vmor %vm415, %vm416
    %v418 = vsel %vm417, %v409, %v414
    %v419 = vrsqrt.pop %v397
    %v420 = vmul.f32 %v419, %v397
    %v421 = vmul.f32 %v420, %v419
    %v422 = vmul.f32 0.5, %v421
    %v423 = vsub.f32 1.5, %v422
    %v424 = vmul.f32 %v419, %v423
    %vm425 = vweird.f32 %v397
    %vm426 = vweird.f32 %v419
    %vm427 = vmor %vm425, %vm426
    %v428 = vsel %vm427, %v419, %v424
    %v429 = vrsqrt.pop %v398
    %v430 = vmul.f32 %v429, %v398
    %v431 = vmul.f32 %v430, %v429
    %v432 = vmul.f32 0.5, %v431
    %v433 = vsub.f32 1.5, %v432
    %v434 = vmul.f32 %v429, %v433
    %vm435 = vweird.f32 %v398
    %vm436 = vweird.f32 %v429
    %vm437 = vmor %vm435, %vm436
    %v438 = vsel %vm437, %v429, %v434
    %v439 = vmul.f32 %v371, %v408
    %v440 = vmul.f32 %v372, %v418
    %v441 = vmul.f32 %v373, %v428
    %v442 = vmul.f32 %v374, %v438
    %443 = vset.pattern.permute.xlu0 3
    %444 = vperm.xlu0 %443, %v257
    %v445 = vpop.permute.xlu0 %444
    %v447 = vmul.f32 %v439, %v445
    %v448 = vmul.f32 %v440, %v445
    %v449 = vmul.f32 %v441, %v445
    %v450 = vmul.f32 %v442, %v445
    %451 = vset.pattern.permute.xlu0 4
    %452 = vperm.xlu0 %451, %v257
    %v453 = vpop.permute.xlu0 %452
    %v455 = vadd.f32 %v447, %v453
    %v456 = vadd.f32 %v448, %v453
    %v457 = vadd.f32 %v449, %v453
    %v458 = vadd.f32 %v450, %v453
    %v459 = vadd.f32 %v455, 3.0
    %v460 = vadd.f32 %v456, 3.0
    %v461 = vadd.f32 %v457, 3.0
    %v462 = vadd.f32 %v458, 3.0
    %v463 = vmax.f32 %v459, 0.0
    %v464 = vmax.f32 %v460, 0.0
    %v465 = vmax.f32 %v461, 0.0
    %v466 = vmax.f32 %v462, 0.0
    %v467 = vmin.f32 %v463, 6.0
    %v468 = vmin.f32 %v464, 6.0
    %v469 = vmin.f32 %v465, 6.0
    %v470 = vmin.f32 %v466, 6.0
    %v471 = vmul.f32 %v455, %v467
    %v472 = vmul.f32 %v456, %v468
    %v473 = vmul.f32 %v457, %v469
    %v474 = vmul.f32 %v458, %v470
    %v475 = vmul.f32 %v471, 0.16666667
    %v476 = vmul.f32 %v472, 0.16666667
    %v477 = vmul.f32 %v473, 0.16666667
    %v478 = vmul.f32 %v474, 0.16666667
    %s479 = scalar_lea.vmem %s1, 8
    %v480 = vld [vmem:[%s479] sm:$0xff]
    %s481 = scalar_lea.vmem %s1, 16
    %v482 = vld [vmem:[%s481] sm:$0xff]
    %v483 = vld [vmem:[%s2] sm:$0xff]
    %485 = vset.pattern.permute.xlu0 5
    %486 = vperm.xlu0 %485, %v483
    %v487 = vpop.permute.xlu0 %486
    %v490 = vsel %vm263, %v480, 0
    %492 = vmatpush.msra.mxu0 0.0
    %493 = vmatpush.msra.mxu0 0.0
    %494 = vmatpush.msra.mxu0 0.0
    %495 = vmatpush.msra.mxu0 0.0
    %496 = vmatpush.msra.mxu0 0.0
    %497 = vmatpush.msra.mxu0 0.0
    %498 = vmatpush.msra.mxu0 0.0
    %499 = vmatpush.msra.mxu0 0.0
    %500 = vmatpush.msra.mxu0 0.0
    %501 = vmatpush.msra.mxu0 0.0
    %502 = vmatpush.msra.mxu0 0.0
    %503 = vmatpush.msra.mxu0 0.0
    %504 = vmatpush.msra.mxu0 0.0
    %505 = vmatpush.msra.mxu0 0.0
    %506 = vmatpush.msra.mxu0 0.0
    %507 = vmatpush.msra.mxu0 %v475
    %508 = vmatmul.f32.gmra.mxu0 %v490
    %v509 = vpop.f32.mrf.mxu0
    %v510 = vadd.f32 %v487, %v509
    %511 = vdwg.mxu0
    %512 = vmatpush.msra.mxu0 0.0
    %513 = vmatpush.msra.mxu0 0.0
    %514 = vmatpush.msra.mxu0 0.0
    %515 = vmatpush.msra.mxu0 0.0
    %516 = vmatpush.msra.mxu0 0.0
    %517 = vmatpush.msra.mxu0 0.0
    %518 = vmatpush.msra.mxu0 0.0
    %519 = vmatpush.msra.mxu0 0.0
    %520 = vmatpush.msra.mxu0 0.0
    %521 = vmatpush.msra.mxu0 0.0
    %522 = vmatpush.msra.mxu0 0.0
    %523 = vmatpush.msra.mxu0 0.0
    %524 = vmatpush.msra.mxu0 0.0
    %525 = vmatpush.msra.mxu0 0.0
    %526 = vmatpush.msra.mxu0 0.0
    %527 = vmatpush.msra.mxu0 %v476
    %528 = vmatmul.f32.gmra.mxu0 %v490
    %v529 = vpop.f32.mrf.mxu0
    %v530 = vadd.f32 %v487, %v529
    %531 = vdwg.mxu0
    %532 = vmatpush.msra.mxu0 0.0
    %533 = vmatpush.msra.mxu0 0.0
    %534 = vmatpush.msra.mxu0 0.0
    %535 = vmatpush.msra.mxu0 0.0
    %536 = vmatpush.msra.mxu0 0.0
    %537 = vmatpush.msra.mxu0 0.0
    %538 = vmatpush.msra.mxu0 0.0
    %539 = vmatpush.msra.mxu0 0.0
    %540 = vmatpush.msra.mxu0 0.0
    %541 = vmatpush.msra.mxu0 0.0
    %542 = vmatpush.msra.mxu0 0.0
    %543 = vmatpush.msra.mxu0 0.0
    %544 = vmatpush.msra.mxu0 0.0
    %545 = vmatpush.msra.mxu0 0.0
    %546 = vmatpush.msra.mxu0 0.0
    %547 = vmatpush.msra.mxu0 %v477
    %548 = vmatmul.f32.gmra.mxu0 %v490
    %v549 = vpop.f32.mrf.mxu0
    %v550 = vadd.f32 %v487, %v549
    %551 = vdwg.mxu0
    %552 = vmatpush.msra.mxu0 0.0
    %553 = vmatpush.msra.mxu0 0.0
    %554 = vmatpush.msra.mxu0 0.0
    %555 = vmatpush.msra.mxu0 0.0
    %556 = vmatpush.msra.mxu0 0.0
    %557 = vmatpush.msra.mxu0 0.0
    %558 = vmatpush.msra.mxu0 0.0
    %559 = vmatpush.msra.mxu0 0.0
    %560 = vmatpush.msra.mxu0 0.0
    %561 = vmatpush.msra.mxu0 0.0
    %562 = vmatpush.msra.mxu0 0.0
    %563 = vmatpush.msra.mxu0 0.0
    %564 = vmatpush.msra.mxu0 0.0
    %565 = vmatpush.msra.mxu0 0.0
    %566 = vmatpush.msra.mxu0 0.0
    %567 = vmatpush.msra.mxu0 %v478
    %568 = vmatmul.f32.gmra.mxu0 %v490
    %v569 = vpop.f32.mrf.mxu0
    %v570 = vadd.f32 %v487, %v569
    %571 = vdwg.mxu0
    %v572 = vld [vmem:[%s2] sm:$0xff]
    %574 = vset.pattern.permute.xlu0 6
    %575 = vperm.xlu0 %574, %v572
    %v576 = vpop.permute.xlu0 %575
    %579 = vrot.lane.b32.xlu0 %v475, 112
    %v580 = vpop.permute.xlu0 %579
    %v583 = vsel %vm263, %v482, 0
    %585 = vmatpush.msra.mxu0 0.0
    %586 = vmatpush.msra.mxu0 0.0
    %587 = vmatpush.msra.mxu0 0.0
    %588 = vmatpush.msra.mxu0 0.0
    %589 = vmatpush.msra.mxu0 0.0
    %590 = vmatpush.msra.mxu0 0.0
    %591 = vmatpush.msra.mxu0 0.0
    %592 = vmatpush.msra.mxu0 0.0
    %593 = vmatpush.msra.mxu0 0.0
    %594 = vmatpush.msra.mxu0 0.0
    %595 = vmatpush.msra.mxu0 0.0
    %596 = vmatpush.msra.mxu0 0.0
    %597 = vmatpush.msra.mxu0 0.0
    %598 = vmatpush.msra.mxu0 0.0
    %599 = vmatpush.msra.mxu0 0.0
    %600 = vmatpush.msra.mxu0 %v580
    %601 = vmatmul.f32.gmra.mxu0 %v583
    %v602 = vpop.f32.mrf.mxu0
    %v603 = vadd.f32 %v576, %v602
    %604 = vdwg.mxu0
    %606 = vrot.lane.b32.xlu0 %v476, 112
    %v607 = vpop.permute.xlu0 %606
    %609 = vmatpush.msra.mxu0 0.0
    %610 = vmatpush.msra.mxu0 0.0
    %611 = vmatpush.msra.mxu0 0.0
    %612 = vmatpush.msra.mxu0 0.0
    %613 = vmatpush.msra.mxu0 0.0
    %614 = vmatpush.msra.mxu0 0.0
    %615 = vmatpush.msra.mxu0 0.0
    %616 = vmatpush.msra.mxu0 0.0
    %617 = vmatpush.msra.mxu0 0.0
    %618 = vmatpush.msra.mxu0 0.0
    %619 = vmatpush.msra.mxu0 0.0
    %620 = vmatpush.msra.mxu0 0.0
    %621 = vmatpush.msra.mxu0 0.0
    %622 = vmatpush.msra.mxu0 0.0
    %623 = vmatpush.msra.mxu0 0.0
    %624 = vmatpush.msra.mxu0 %v607
    %625 = vmatmul.f32.gmra.mxu0 %v583
    %v626 = vpop.f32.mrf.mxu0
    %v627 = vadd.f32 %v576, %v626
    %628 = vdwg.mxu0
    %630 = vrot.lane.b32.xlu0 %v477, 112
    %v631 = vpop.permute.xlu0 %630
    %633 = vmatpush.msra.mxu0 0.0
    %634 = vmatpush.msra.mxu0 0.0
    %635 = vmatpush.msra.mxu0 0.0
    %636 = vmatpush.msra.mxu0 0.0
    %637 = vmatpush.msra.mxu0 0.0
    %638 = vmatpush.msra.mxu0 0.0
    %639 = vmatpush.msra.mxu0 0.0
    %640 = vmatpush.msra.mxu0 0.0
    %641 = vmatpush.msra.mxu0 0.0
    %642 = vmatpush.msra.mxu0 0.0
    %643 = vmatpush.msra.mxu0 0.0
    %644 = vmatpush.msra.mxu0 0.0
    %645 = vmatpush.msra.mxu0 0.0
    %646 = vmatpush.msra.mxu0 0.0
    %647 = vmatpush.msra.mxu0 0.0
    %648 = vmatpush.msra.mxu0 %v631
    %649 = vmatmul.f32.gmra.mxu0 %v583
    %v650 = vpop.f32.mrf.mxu0
    %v651 = vadd.f32 %v576, %v650
    %652 = vdwg.mxu0
    %654 = vrot.lane.b32.xlu0 %v478, 112
    %v655 = vpop.permute.xlu0 %654
    %657 = vmatpush.msra.mxu0 0.0
    %658 = vmatpush.msra.mxu0 0.0
    %659 = vmatpush.msra.mxu0 0.0
    %660 = vmatpush.msra.mxu0 0.0
    %661 = vmatpush.msra.mxu0 0.0
    %662 = vmatpush.msra.mxu0 0.0
    %663 = vmatpush.msra.mxu0 0.0
    %664 = vmatpush.msra.mxu0 0.0
    %665 = vmatpush.msra.mxu0 0.0
    %666 = vmatpush.msra.mxu0 0.0
    %667 = vmatpush.msra.mxu0 0.0
    %668 = vmatpush.msra.mxu0 0.0
    %669 = vmatpush.msra.mxu0 0.0
    %670 = vmatpush.msra.mxu0 0.0
    %671 = vmatpush.msra.mxu0 0.0
    %672 = vmatpush.msra.mxu0 %v655
    %673 = vmatmul.f32.gmra.mxu0 %v583
    %v674 = vpop.f32.mrf.mxu0
    %v675 = vadd.f32 %v576, %v674
    %676 = vdwg.mxu0
    %678 = vset.pattern.permute.xlu0 32
    %679 = vperm.xlu0 %678, %v131
    %v680 = vpop.permute.xlu0 %679
    %683 = vset.pattern.permute.xlu0 32
    %684 = vperm.xlu0 %683, %v137
    %v685 = vpop.permute.xlu0 %684
    %688 = vset.pattern.permute.xlu0 32
    %689 = vperm.xlu0 %688, %v143
    %v690 = vpop.permute.xlu0 %689
    %693 = vset.pattern.permute.xlu0 32
    %694 = vperm.xlu0 %693, %v149
    %v695 = vpop.permute.xlu0 %694
    %v697 = vmul.f32 %v510, %v680
    %v698 = vmul.f32 %v530, %v685
    %v699 = vmul.f32 %v550, %v690
    %v700 = vmul.f32 %v570, %v695
    %v701 = vld [vmem:[%s4] sm:$0xff]
    %v702 = vld [vmem:[%s4 + $0x8] sm:$0xff]
    %v703 = vld [vmem:[%s4 + $0x10] sm:$0xff]
    %v704 = vld [vmem:[%s4 + $0x18] sm:$0xff]
    %v705 = vld [vmem:[%s4 + $0x20] sm:$0xff]
    %v706 = vld [vmem:[%s4 + $0x28] sm:$0xff]
    %v707 = vld [vmem:[%s4 + $0x30] sm:$0xff]
    %v708 = vld [vmem:[%s4 + $0x38] sm:$0xff]
    %v709 = vld [vmem:[%s0] sm:$0xff]
    %v710 = vld [vmem:[%s0 + $0x8] sm:$0xff]
    %v711 = vld [vmem:[%s0 + $0x40] sm:$0xff]
    %v712 = vld [vmem:[%s0 + $0x48] sm:$0xff]
    %714 = vset.pattern.permute.xlu0 0
    %715 = vperm.xlu0 %714, %v210
    %v716 = vpop.permute.xlu0 %715
    %719 = vset.pattern.permute.xlu0 0
    %720 = vperm.xlu0 %719, %v240
    %v721 = vpop.permute.xlu0 %720
    %v723 = vmul.f32 %v709, %v716
    %v724 = vmul.f32 %v710, %v716
    %v725 = vmul.f32 %v711, %v721
    %v726 = vmul.f32 %v712, %v721
    %727 = vst [vmem:[#allocation2] sm:$0xff] %v723
    %728 = vst [vmem:[#allocation2 + $0x8] sm:$0xff] %v724
    %729 = vst [vmem:[#allocation2 + $0x40] sm:$0xff] %v725
    %730 = vst [vmem:[#allocation2 + $0x48] sm:$0xff] %v726
    %vm731 = vcmask 130048
    %v733 = vsel %vm731, %v697, 0
    %v736 = vsel %vm731, %v699, 0
    %738 = vmatpush.msra.mxu0 0.0
    %739 = vmatpush.msra.mxu0 0.0
    %740 = vmatpush.msra.mxu0 0.0
    %741 = vmatpush.msra.mxu0 0.0
    %742 = vmatpush.msra.mxu0 0.0
    %743 = vmatpush.msra.mxu0 0.0
    %744 = vmatpush.msra.mxu0 0.0
    %745 = vmatpush.msra.mxu0 0.0
    %746 = vmatpush.msra.mxu0 0.0
    %747 = vmatpush.msra.mxu0 0.0
    %748 = vmatpush.msra.mxu0 0.0
    %749 = vmatpush.msra.mxu0 0.0
    %750 = vmatpush.msra.mxu0 0.0
    %751 = vmatpush.msra.mxu0 0.0
    %752 = vmatpush.msra.mxu0 %v703
    %753 = vmatpush.msra.mxu0 %v701
    %754 = vmatmul.f32.gmra.mxu0 %v733
    %v755 = vpop.f32.mrf.mxu0
    %v756 = vadd.f32 0.0, %v755
    %757 = vmatmul.f32.gmra.mxu0 %v736
    %v758 = vpop.f32.mrf.mxu0
    %v759 = vadd.f32 0.0, %v758
    %760 = vdwg.mxu0
    %761 = vmatpush.msra.mxu0 0.0
    %762 = vmatpush.msra.mxu0 0.0
    %763 = vmatpush.msra.mxu0 0.0
    %764 = vmatpush.msra.mxu0 0.0
    %765 = vmatpush.msra.mxu0 0.0
    %766 = vmatpush.msra.mxu0 0.0
    %767 = vmatpush.msra.mxu0 0.0
    %768 = vmatpush.msra.mxu0 0.0
    %769 = vmatpush.msra.mxu0 0.0
    %770 = vmatpush.msra.mxu0 0.0
    %771 = vmatpush.msra.mxu0 0.0
    %772 = vmatpush.msra.mxu0 0.0
    %773 = vmatpush.msra.mxu0 0.0
    %774 = vmatpush.msra.mxu0 0.0
    %775 = vmatpush.msra.mxu0 %v704
    %776 = vmatpush.msra.mxu0 %v702
    %777 = vmatmul.f32.gmra.mxu0 %v733
    %v778 = vpop.f32.mrf.mxu0
    %v779 = vadd.f32 0.0, %v778
    %780 = vmatmul.f32.gmra.mxu0 %v736
    %v781 = vpop.f32.mrf.mxu0
    %v782 = vadd.f32 0.0, %v781
    %783 = vdwg.mxu0
    %v785 = vsel %vm731, %v603, 0
    %v788 = vsel %vm731, %v651, 0
    %790 = vmatpush.msra.mxu0 0.0
    %791 = vmatpush.msra.mxu0 0.0
    %792 = vmatpush.msra.mxu0 0.0
    %793 = vmatpush.msra.mxu0 0.0
    %794 = vmatpush.msra.mxu0 0.0
    %795 = vmatpush.msra.mxu0 0.0
    %796 = vmatpush.msra.mxu0 0.0
    %797 = vmatpush.msra.mxu0 0.0
    %798 = vmatpush.msra.mxu0 0.0
    %799 = vmatpush.msra.mxu0 0.0
    %800 = vmatpush.msra.mxu0 0.0
    %801 = vmatpush.msra.mxu0 0.0
    %802 = vmatpush.msra.mxu0 0.0
    %803 = vmatpush.msra.mxu0 0.0
    %804 = vmatpush.msra.mxu0 %v707
    %805 = vmatpush.msra.mxu0 %v705
    %806 = vmatmul.f32.gmra.mxu0 %v785
    %v807 = vpop.f32.mrf.mxu0
    %v808 = vadd.f32 0.0, %v807
    %809 = vmatmul.f32.gmra.mxu0 %v788
    %v810 = vpop.f32.mrf.mxu0
    %v811 = vadd.f32 0.0, %v810
    %812 = vdwg.mxu0
    %813 = vmatpush.msra.mxu0 0.0
    %814 = vmatpush.msra.mxu0 0.0
    %815 = vmatpush.msra.mxu0 0.0
    %816 = vmatpush.msra.mxu0 0.0
    %817 = vmatpush.msra.mxu0 0.0
    %818 = vmatpush.msra.mxu0 0.0
    %819 = vmatpush.msra.mxu0 0.0
    %820 = vmatpush.msra.mxu0 0.0
    %821 = vmatpush.msra.mxu0 0.0
    %822 = vmatpush.msra.mxu0 0.0
    %823 = vmatpush.msra.mxu0 0.0
    %824 = vmatpush.msra.mxu0 0.0
    %825 = vmatpush.msra.mxu0 0.0
    %826 = vmatpush.msra.mxu0 0.0
    %827 = vmatpush.msra.mxu0 %v708
    %828 = vmatpush.msra.mxu0 %v706
    %829 = vmatmul.f32.gmra.mxu0 %v785
    %v830 = vpop.f32.mrf.mxu0
    %v831 = vadd.f32 0.0, %v830
    %832 = vmatmul.f32.gmra.mxu0 %v788
    %v833 = vpop.f32.mrf.mxu0
    %v834 = vadd.f32 0.0, %v833
    %835 = vdwg.mxu0
    %v836 = vmul.f32 %v756, %v808
    %v837 = vmul.f32 %v779, %v831
    %v838 = vmul.f32 %v759, %v811
    %v839 = vmul.f32 %v782, %v834
    %v840 = vld [vmem:[%s0 + $0x10] sm:$0xff]
    %v841 = vld [vmem:[%s0 + $0x18] sm:$0xff]
    %v842 = vld [vmem:[%s0 + $0x50] sm:$0xff]
    %v843 = vld [vmem:[%s0 + $0x58] sm:$0xff]
    %v844 = vxor.u32 %v836, 2147483648
    %v845 = vxor.u32 %v837, 2147483648
    %v846 = vxor.u32 %v838, 2147483648
    %v847 = vxor.u32 %v839, 2147483648
    %v848 = vmul.f32 %v844, 1.442695
    %v849 = vpow.pop %v848
    %v850 = vmul.f32 %v845, 1.442695
    %v851 = vpow.pop %v850
    %v852 = vmul.f32 %v846, 1.442695
    %v853 = vpow.pop %v852
    %v854 = vmul.f32 %v847, 1.442695
    %v855 = vpow.pop %v854
    %v856 = vadd.f32 %v849, 1.0
    %v857 = vadd.f32 %v851, 1.0
    %v858 = vadd.f32 %v853, 1.0
    %v859 = vadd.f32 %v855, 1.0
    %v860 = vrcp.pop %v856
    %v861 = vmul.f32 %v856, %v860
    %v862 = vsub.f32 1.0, %v861
    %v863 = vmul.f32 %v860, %v862
    %v864 = vadd.f32 %v860, %v863
    %vm865 = vweird.f32 %v856
    %vm866 = vweird.f32 %v860
    %vm867 = vmor %vm865, %vm866
    %v868 = vsel %vm867, %v860, %v864
    %v869 = vand.u32 2147483647, %v856
    %vm870 = vcmp.eq.f32.partialorder %v869, 8.507059e+37
    %v871 = vand.u32 %v856, 2147483648
    %v872 = vor.u32 1.1754944e-38, %v871
    %v873 = vsel %vm870, %v872, %v868
    %v874 = vmul.f32 1.0, %v873
    %v875 = vrcp.pop %v857
    %v876 = vmul.f32 %v857, %v875
    %v877 = vsub.f32 1.0, %v876
    %v878 = vmul.f32 %v875, %v877
    %v879 = vadd.f32 %v875, %v878
    %vm880 = vweird.f32 %v857
    %vm881 = vweird.f32 %v875
    %vm882 = vmor %vm880, %vm881
    %v883 = vsel %vm882, %v875, %v879
    %v884 = vand.u32 2147483647, %v857
    %vm885 = vcmp.eq.f32.partialorder %v884, 8.507059e+37
    %v886 = vand.u32 %v857, 2147483648
    %v887 = vor.u32 1.1754944e-38, %v886
    %v888 = vsel %vm885, %v887, %v883
    %v889 = vmul.f32 1.0, %v888
    %v890 = vrcp.pop %v858
    %v891 = vmul.f32 %v858, %v890
    %v892 = vsub.f32 1.0, %v891
    %v893 = vmul.f32 %v890, %v892
    %v894 = vadd.f32 %v890, %v893
    %vm895 = vweird.f32 %v858
    %vm896 = vweird.f32 %v890
    %vm897 = vmor %vm895, %vm896
    %v898 = vsel %vm897, %v890, %v894
    %v899 = vand.u32 2147483647, %v858
    %vm900 = vcmp.eq.f32.partialorder %v899, 8.507059e+37
    %v901 = vand.u32 %v858, 2147483648
    %v902 = vor.u32 1.1754944e-38, %v901
    %v903 = vsel %vm900, %v902, %v898
    %v904 = vmul.f32 1.0, %v903
    %v905 = vrcp.pop %v859
    %v906 = vmul.f32 %v859, %v905
    %v907 = vsub.f32 1.0, %v906
    %v908 = vmul.f32 %v905, %v907
    %v909 = vadd.f32 %v905, %v908
    %vm910 = vweird.f32 %v859
    %vm911 = vweird.f32 %v905
    %vm912 = vmor %vm910, %vm911
    %v913 = vsel %vm912, %v905, %v909
    %v914 = vand.u32 2147483647, %v859
    %vm915 = vcmp.eq.f32.partialorder %v914, 8.507059e+37
    %v916 = vand.u32 %v859, 2147483648
    %v917 = vor.u32 1.1754944e-38, %v916
    %v918 = vsel %vm915, %v917, %v913
    %v919 = vmul.f32 1.0, %v918
    %v920 = vmul.f32 %v840, %v874
    %v921 = vmul.f32 %v841, %v889
    %v922 = vmul.f32 %v842, %v904
    %v923 = vmul.f32 %v843, %v919
    %924 = vst [vmem:[#allocation2 + $0x20] sm:$0xff] %v920
    %925 = vst [vmem:[#allocation2 + $0x28] sm:$0xff] %v921
    %926 = vst [vmem:[#allocation2 + $0x60] sm:$0xff] %v922
    %927 = vst [vmem:[#allocation2 + $0x68] sm:$0xff] %v923
    %v928 = vld [vmem:[%s0 + $0x20] sm:$0xff]
    %v929 = vld [vmem:[%s0 + $0x28] sm:$0xff]
    %v930 = vld [vmem:[%s0 + $0x60] sm:$0xff]
    %v931 = vld [vmem:[%s0 + $0x68] sm:$0xff]
    %933 = vset.pattern.permute.xlu0 0
    %934 = vperm.xlu0 %933, %v225
    %v935 = vpop.permute.xlu0 %934
    %938 = vset.pattern.permute.xlu0 0
    %939 = vperm.xlu0 %938, %v255
    %v940 = vpop.permute.xlu0 %939
    %v942 = vmul.f32 %v928, %v935
    %v943 = vmul.f32 %v929, %v935
    %v944 = vmul.f32 %v930, %v940
    %v945 = vmul.f32 %v931, %v940
    %946 = vst [vmem:[#allocation2 + $0x10] sm:$0xff] %v942
    %947 = vst [vmem:[#allocation2 + $0x18] sm:$0xff] %v943
    %948 = vst [vmem:[#allocation2 + $0x50] sm:$0xff] %v944
    %949 = vst [vmem:[#allocation2 + $0x58] sm:$0xff] %v945
    %v951 = vsel %vm731, %v698, 0
    %v954 = vsel %vm731, %v700, 0
    %956 = vmatpush.msra.mxu0 0.0
    %957 = vmatpush.msra.mxu0 0.0
    %958 = vmatpush.msra.mxu0 0.0
    %959 = vmatpush.msra.mxu0 0.0
    %960 = vmatpush.msra.mxu0 0.0
    %961 = vmatpush.msra.mxu0 0.0
    %962 = vmatpush.msra.mxu0 0.0
    %963 = vmatpush.msra.mxu0 0.0
    %964 = vmatpush.msra.mxu0 0.0
    %965 = vmatpush.msra.mxu0 0.0
    %966 = vmatpush.msra.mxu0 0.0
    %967 = vmatpush.msra.mxu0 0.0
    %968 = vmatpush.msra.mxu0 0.0
    %969 = vmatpush.msra.mxu0 0.0
    %970 = vmatpush.msra.mxu0 %v703
    %971 = vmatpush.msra.mxu0 %v701
    %972 = vmatmul.f32.gmra.mxu0 %v951
    %v973 = vpop.f32.mrf.mxu0
    %v974 = vadd.f32 0.0, %v973
    %975 = vmatmul.f32.gmra.mxu0 %v954
    %v976 = vpop.f32.mrf.mxu0
    %v977 = vadd.f32 0.0, %v976
    %978 = vdwg.mxu0
    %979 = vmatpush.msra.mxu0 0.0
    %980 = vmatpush.msra.mxu0 0.0
    %981 = vmatpush.msra.mxu0 0.0
    %982 = vmatpush.msra.mxu0 0.0
    %983 = vmatpush.msra.mxu0 0.0
    %984 = vmatpush.msra.mxu0 0.0
    %985 = vmatpush.msra.mxu0 0.0
    %986 = vmatpush.msra.mxu0 0.0
    %987 = vmatpush.msra.mxu0 0.0
    %988 = vmatpush.msra.mxu0 0.0
    %989 = vmatpush.msra.mxu0 0.0
    %990 = vmatpush.msra.mxu0 0.0
    %991 = vmatpush.msra.mxu0 0.0
    %992 = vmatpush.msra.mxu0 0.0
    %993 = vmatpush.msra.mxu0 %v704
    %994 = vmatpush.msra.mxu0 %v702
    %995 = vmatmul.f32.gmra.mxu0 %v951
    %v996 = vpop.f32.mrf.mxu0
    %v997 = vadd.f32 0.0, %v996
    %998 = vmatmul.f32.gmra.mxu0 %v954
    %v999 = vpop.f32.mrf.mxu0
    %v1000 = vadd.f32 0.0, %v999
    %1001 = vdwg.mxu0
    %v1003 = vsel %vm731, %v627, 0
    %v1006 = vsel %vm731, %v675, 0
    %1008 = vmatpush.msra.mxu0 0.0
    %1009 = vmatpush.msra.mxu0 0.0
    %1010 = vmatpush.msra.mxu0 0.0
    %1011 = vmatpush.msra.mxu0 0.0
    %1012 = vmatpush.msra.mxu0 0.0
    %1013 = vmatpush.msra.mxu0 0.0
    %1014 = vmatpush.msra.mxu0 0.0
    %1015 = vmatpush.msra.mxu0 0.0
    %1016 = vmatpush.msra.mxu0 0.0
    %1017 = vmatpush.msra.mxu0 0.0
    %1018 = vmatpush.msra.mxu0 0.0
    %1019 = vmatpush.msra.mxu0 0.0
    %1020 = vmatpush.msra.mxu0 0.0
    %1021 = vmatpush.msra.mxu0 0.0
    %1022 = vmatpush.msra.mxu0 %v707
    %1023 = vmatpush.msra.mxu0 %v705
    %1024 = vmatmul.f32.gmra.mxu0 %v1003
    %v1025 = vpop.f32.mrf.mxu0
    %v1026 = vadd.f32 0.0, %v1025
    %1027 = vmatmul.f32.gmra.mxu0 %v1006
    %v1028 = vpop.f32.mrf.mxu0
    %v1029 = vadd.f32 0.0, %v1028
    %1030 = vdwg.mxu0
    %1031 = vmatpush.msra.mxu0 0.0
    %1032 = vmatpush.msra.mxu0 0.0
    %1033 = vmatpush.msra.mxu0 0.0
    %1034 = vmatpush.msra.mxu0 0.0
    %1035 = vmatpush.msra.mxu0 0.0
    %1036 = vmatpush.msra.mxu0 0.0
    %1037 = vmatpush.msra.mxu0 0.0
    %1038 = vmatpush.msra.mxu0 0.0
    %1039 = vmatpush.msra.mxu0 0.0
    %1040 = vmatpush.msra.mxu0 0.0
    %1041 = vmatpush.msra.mxu0 0.0
    %1042 = vmatpush.msra.mxu0 0.0
    %1043 = vmatpush.msra.mxu0 0.0
    %1044 = vmatpush.msra.mxu0 0.0
    %1045 = vmatpush.msra.mxu0 %v708
    %1046 = vmatpush.msra.mxu0 %v706
    %1047 = vmatmul.f32.gmra.mxu0 %v1003
    %v1048 = vpop.f32.mrf.mxu0
    %v1049 = vadd.f32 0.0, %v1048
    %1050 = vmatmul.f32.gmra.mxu0 %v1006
    %v1051 = vpop.f32.mrf.mxu0
    %v1052 = vadd.f32 0.0, %v1051
    %1053 = vdwg.mxu0
    %v1054 = vmul.f32 %v974, %v1026
    %v1055 = vmul.f32 %v997, %v1049
    %v1056 = vmul.f32 %v977, %v1029
    %v1057 = vmul.f32 %v1000, %v1052
    %v1058 = vld [vmem:[%s0 + $0x30] sm:$0xff]
    %v1059 = vld [vmem:[%s0 + $0x38] sm:$0xff]
    %v1060 = vld [vmem:[%s0 + $0x70] sm:$0xff]
    %v1061 = vld [vmem:[%s0 + $0x78] sm:$0xff]
    %v1062 = vxor.u32 %v1054, 2147483648
    %v1063 = vxor.u32 %v1055, 2147483648
    %v1064 = vxor.u32 %v1056, 2147483648
    %v1065 = vxor.u32 %v1057, 2147483648
    %v1066 = vmul.f32 %v1062, 1.442695
    %v1067 = vpow.pop %v1066
    %v1068 = vmul.f32 %v1063, 1.442695
    %v1069 = vpow.pop %v1068
    %v1070 = vmul.f32 %v1064, 1.442695
    %v1071 = vpow.pop %v1070
    %v1072 = vmul.f32 %v1065, 1.442695
    %v1073 = vpow.pop %v1072
    %v1074 = vadd.f32 %v1067, 1.0
    %v1075 = vadd.f32 %v1069, 1.0
    %v1076 = vadd.f32 %v1071, 1.0
    %v1077 = vadd.f32 %v1073, 1.0
    %v1078 = vrcp.pop %v1074
    %v1079 = vmul.f32 %v1074, %v1078
    %v1080 = vsub.f32 1.0, %v1079
    %v1081 = vmul.f32 %v1078, %v1080
    %v1082 = vadd.f32 %v1078, %v1081
    %vm1083 = vweird.f32 %v1074
    %vm1084 = vweird.f32 %v1078
    %vm1085 = vmor %vm1083, %vm1084
    %v1086 = vsel %vm1085, %v1078, %v1082
    %v1087 = vand.u32 2147483647, %v1074
    %vm1088 = vcmp.eq.f32.partialorder %v1087, 8.507059e+37
    %v1089 = vand.u32 %v1074, 2147483648
    %v1090 = vor.u32 1.1754944e-38, %v1089
    %v1091 = vsel %vm1088, %v1090, %v1086
    %v1092 = vmul.f32 1.0, %v1091
    %v1093 = vrcp.pop %v1075
    %v1094 = vmul.f32 %v1075, %v1093
    %v1095 = vsub.f32 1.0, %v1094
    %v1096 = vmul.f32 %v1093, %v1095
    %v1097 = vadd.f32 %v1093, %v1096
    %vm1098 = vweird.f32 %v1075
    %vm1099 = vweird.f32 %v1093
    %vm1100 = vmor %vm1098, %vm1099
    %v1101 = vsel %vm1100, %v1093, %v1097
    %v1102 = vand.u32 2147483647, %v1075
    %vm1103 = vcmp.eq.f32.partialorder %v1102, 8.507059e+37
    %v1104 = vand.u32 %v1075, 2147483648
    %v1105 = vor.u32 1.1754944e-38, %v1104
    %v1106 = vsel %vm1103, %v1105, %v1101
    %v1107 = vmul.f32 1.0, %v1106
    %v1108 = vrcp.pop %v1076
    %v1109 = vmul.f32 %v1076, %v1108
    %v1110 = vsub.f32 1.0, %v1109
    %v1111 = vmul.f32 %v1108, %v1110
    %v1112 = vadd.f32 %v1108, %v1111
    %vm1113 = vweird.f32 %v1076
    %vm1114 = vweird.f32 %v1108
    %vm1115 = vmor %vm1113, %vm1114
    %v1116 = vsel %vm1115, %v1108, %v1112
    %v1117 = vand.u32 2147483647, %v1076
    %vm1118 = vcmp.eq.f32.partialorder %v1117, 8.507059e+37
    %v1119 = vand.u32 %v1076, 2147483648
    %v1120 = vor.u32 1.1754944e-38, %v1119
    %v1121 = vsel %vm1118, %v1120, %v1116
    %v1122 = vmul.f32 1.0, %v1121
    %v1123 = vrcp.pop %v1077
    %v1124 = vmul.f32 %v1077, %v1123
    %v1125 = vsub.f32 1.0, %v1124
    %v1126 = vmul.f32 %v1123, %v1125
    %v1127 = vadd.f32 %v1123, %v1126
    %vm1128 = vweird.f32 %v1077
    %vm1129 = vweird.f32 %v1123
    %vm1130 = vmor %vm1128, %vm1129
    %v1131 = vsel %vm1130, %v1123, %v1127
    %v1132 = vand.u32 2147483647, %v1077
    %vm1133 = vcmp.eq.f32.partialorder %v1132, 8.507059e+37
    %v1134 = vand.u32 %v1077, 2147483648
    %v1135 = vor.u32 1.1754944e-38, %v1134
    %v1136 = vsel %vm1133, %v1135, %v1131
    %v1137 = vmul.f32 1.0, %v1136
    %v1138 = vmul.f32 %v1058, %v1092
    %v1139 = vmul.f32 %v1059, %v1107
    %v1140 = vmul.f32 %v1060, %v1122
    %v1141 = vmul.f32 %v1061, %v1137
    %1142 = vst [vmem:[#allocation2 + $0x30] sm:$0xff] %v1138
    %1143 = vst [vmem:[#allocation2 + $0x38] sm:$0xff] %v1139
    %1144 = vst [vmem:[#allocation2 + $0x70] sm:$0xff] %v1140
    %1145 = vst [vmem:[#allocation2 + $0x78] sm:$0xff] %v1141
    // Predicated region
    $region22: #{tpu_custom_call.1} parent=1 // pred_check
      _
    $region23: #{tpu_custom_call.1} parent=1 // pred_check_branch
      %1147 = sbr.rel (0) target = $region25
    $region24: #{tpu_custom_call.1} parent=1 // pred_region
      %1149 = vsyncadd [#allocation3], 0
      %s1150 = sshll.u32 [#allocation2], 4
      %s1151 = int_to_ptr.vmem [resolvable:$true] %s1150
      %s1152 = sshll.u32 %s5, 4
      %s1153 = int_to_ptr.hbm [resolvable:$true] %s1152
      %1158 = dma.vmem_to_hbm [thread:$0]  %s1151, 2048, %s1153, [#allocation3], 512, 512, 32
    $region25: #{tpu_custom_call.1} parent=1 // pred_fallthru
      _
    // Predicated region
    $region26: #{tpu_custom_call.1} parent=1 // pred_check
      _
    $region27: #{tpu_custom_call.1} parent=1 // pred_check_branch
      %1160 = sbr.rel (0) target = $region29
    $region28: #{tpu_custom_call.1} parent=1 // pred_region
      %1162 = dma.done [#allocation3], 2048
    $region29: #{tpu_custom_call.1} parent=1 // pred_fallthru
      _
    %1163 = vsyncpa [#allocation3], 1

</llo_original>
